<compile_context>
chip_gen: v7x
topology: tpu7x:2x2x1
jax: 0.10.0
libtpu: 0.0.40
codegen_flags: <defaults>
</compile_context>

<pallas_src>
import functools
import math

import numpy as np
import jax
import jax.numpy as jnp
from jax.experimental import pallas as pl
from jax.experimental.pallas import tpu as pltpu

N_QUBITS = 4
LAYERS = 2                          # encoder depth -> encoder_param_cnt = LAYERS*N_QUBITS
DIM = 1 << N_QUBITS
N_ENC_PARAMS = LAYERS * N_QUBITS
ROW_PACK = 8                        # instances packed on the sublane axis (f32 vreg rows)
LANE = 128                          # in-kernel lane-chunk width (one f32 vreg = [8, 128])
MAX_TILE_V = 4096                   # cap on per-step lane columns (VMEM ~ 512*TILE_V bytes dbl-buf)
TARGET_GRID_STEPS = 4               # >= 2 steps per TensorCore so v7x megacore can shard


def _cz_ring_diag(n_qubits: int) -> np.ndarray:
    """Diagonal (+-1) of the CZ entangling ring prod_a CZ(a, (a+1) % n)."""
    dim = 1 << n_qubits
    d = np.ones((dim,), dtype=np.float64)
    for a in range(n_qubits):
        b = (a + 1) % n_qubits
        for s in range(dim):
            if ((s >> a) & 1) and ((s >> b) & 1):
                d[s] *= -1.0
    return d


_CZ_D = _cz_ring_diag(N_QUBITS)     # compile-time Python constants only


def _tree_sum(xs):
    """Balanced binary-tree sum of a Python list of arrays."""
    xs = list(xs)
    while len(xs) > 1:
        nxt = [xs[i] + xs[i + 1] for i in range(0, len(xs) - 1, 2)]
        if len(xs) % 2:
            nxt.append(xs[-1])
        xs = nxt
    return xs[0]


def _qae_kernel(x_ref, enc_cs_ref, out_ref, *, n_chunks):
    """Exact state-vector simulation of the QAE encoder circuit.

    x_ref:      [N_QUBITS, ROW_PACK, tile_v]   embedding angles (VMEM)
    enc_cs_ref: [2, LAYERS*N_QUBITS]           cos/sin of half encoder params (SMEM)
    out_ref:    [N_QUBITS, ROW_PACK, tile_v]   <Z_q> per instance (VMEM)

    The lane axis is strip-mined in 128-wide chunks inside a fori_loop so the
    live vreg set (16 amplitude vregs + trig + temps) never spills.
    """
    # ---- hoisted, loop-invariant scalar work (SMEM reads -> sregs) ----------
    enc_c = [enc_cs_ref[0, i] for i in range(N_ENC_PARAMS)]
    enc_s = [enc_cs_ref[1, i] for i in range(N_ENC_PARAMS)]

    def chunk_compute(v0):
        # ---- RY angle embedding of |0...0>: product state --------------------
        # amp[s] = prod_q (cos(x_q/2) if bit_q(s) == 0 else sin(x_q/2))
        half_x = x_ref[:, :, pl.ds(v0, LANE)] * 0.5            # [4, 8, 128]
        cx = jnp.cos(half_x)                                    # one EUP pass
        sx = jnp.sin(half_x)                                    # one EUP pass
        f = [(cx[q], sx[q]) for q in range(N_QUBITS)]           # each [8, 128]
        p01 = [[f[0][b0] * f[1][b1] for b1 in (0, 1)] for b0 in (0, 1)]
        p23 = [[f[2][b2] * f[3][b3] for b3 in (0, 1)] for b2 in (0, 1)]
        amp = [p01[s & 1][(s >> 1) & 1] * p23[(s >> 2) & 1][(s >> 3) & 1]
               for s in range(DIM)]

        # ---- encoder layers ---------------------------------------------------
        # Each RY is 8 independent 2x2 rotations on amplitude pairs (s, s^2^q).
        # CZ ring after layer 1 is folded into layer 2's generators (G' = D G D,
        # compile-time sign flips); the CZ ring before measurement is a no-op
        # for |amp|^2 and is dropped.
        for l in range(LAYERS):
            conjugate = (l % 2 == 1)
            for q in range(N_QUBITS):
                idx = l * N_QUBITS + q
                # One splat per gate per chunk (2*8 = 16 VPU ops/chunk) keeps
                # the live vreg set small vs. hoisting 16 broadcasts.
                ce = jnp.full((ROW_PACK, LANE), enc_c[idx], dtype=jnp.float32)
                se = jnp.full((ROW_PACK, LANE), enc_s[idx], dtype=jnp.float32)
                for s0 in range(DIM):
                    if (s0 >> q) & 1:
                        continue
                    s1 = s0 | (1 << q)
                    sgn = (_CZ_D[s0] * _CZ_D[s1]) if conjugate else 1.0
                    a0 = amp[s0]
                    a1 = amp[s1]
                    # FMA-friendly form (v7x may fuse mul+add): t = se*a; c*a -/+ t
                    t0 = se * a1
                    t1 = se * a0
                    if sgn > 0.0:
                        amp[s0] = ce * a0 - t0
                        amp[s1] = ce * a1 + t1
                    else:
                        amp[s0] = ce * a0 + t0
                        amp[s1] = ce * a1 - t1

        # ---- measurement: <Z_q> via shared butterfly partial sums -------------
        probs = [a * a for a in amp]                            # 16 squares
        sum0 = [probs[2 * k] + probs[2 * k + 1] for k in range(8)]
        dif0 = [probs[2 * k] - probs[2 * k + 1] for k in range(8)]
        z0 = _tree_sum(dif0)                                    # <Z_0>
        sum1 = [sum0[2 * k] + sum0[2 * k + 1] for k in range(4)]
        dif1 = [sum0[2 * k] - sum0[2 * k + 1] for k in range(4)]
        z1 = _tree_sum(dif1)                                    # <Z_1>
        sum2 = [sum1[0] + sum1[1], sum1[2] + sum1[3]]
        dif2 = [sum1[0] - sum1[1], sum1[2] - sum1[3]]
        z2 = dif2[0] + dif2[1]                                  # <Z_2>
        z3 = sum2[0] - sum2[1]                                  # <Z_3>

        zs = [z0, z1, z2, z3]
        for q in range(N_QUBITS):
            out_ref[q, :, pl.ds(v0, LANE)] = zs[q]

    if n_chunks == 1:
        chunk_compute(0)                                        # static slice
    else:
        def body(c, carry):
            chunk_compute(pl.multiple_of(c * LANE, LANE))
            return carry
        jax.lax.fori_loop(0, n_chunks, body, 0)


def _round_up(a: int, b: int) -> int:
    return ((a + b - 1) // b) * b


def _choose_tiling(batch: int):
    """Pick (tile_v, grid_steps, cols) for the packed [4, 8, cols] layout."""
    cols = _round_up(max(1, -(-batch // ROW_PACK)), LANE)       # lane columns needed
    grid = max(1, min(TARGET_GRID_STEPS, cols // LANE))
    tile_v = min(_round_up(-(-cols // grid), LANE), MAX_TILE_V)
    grid = -(-cols // tile_v)
    cols = grid * tile_v
    return tile_v, grid, cols


def _qae_packed_call(x_packed, enc_cs, *, tile_v):
    """pallas_call on the qubit-major packed layout [N_QUBITS, ROW_PACK, cols]."""
    _, _, cols = x_packed.shape
    grid = (cols // tile_v,)
    n_chunks = tile_v // LANE
    kernel = functools.partial(_qae_kernel, n_chunks=n_chunks)
    return pl.pallas_call(
        kernel,
        out_shape=jax.ShapeDtypeStruct((N_QUBITS, ROW_PACK, cols), jnp.float32),
        grid=grid,
        in_specs=[
            pl.BlockSpec((N_QUBITS, ROW_PACK, tile_v), lambda j: (0, 0, j)),
            pl.BlockSpec(memory_space=pltpu.MemorySpace.SMEM),
        ],
        out_specs=pl.BlockSpec((N_QUBITS, ROW_PACK, tile_v), lambda j: (0, 0, j)),
        compiler_params=pltpu.CompilerParams(
            dimension_semantics=("parallel",)),     # shards steps across v7x's 2 TCs
    )(x_packed, enc_cs)


def _encoder_cos_sin(encoder_params):
    half_theta = 0.5 * encoder_params.astype(jnp.float32)
    return jnp.stack([jnp.cos(half_theta), jnp.sin(half_theta)], axis=0)   # [2, 8]


def _qae_forward_impl(x, encoder_params):
    """Forward pass of QAEModule: x [batch, N_QUBITS] -> [batch, N_QUBITS] f32."""
    batch = x.shape[0]
    assert x.shape[1] == N_QUBITS
    assert encoder_params.shape == (N_ENC_PARAMS,)

    tile_v, _, cols = _choose_tiling(batch)
    padded = cols * ROW_PACK

    # Pack: instance i = u * cols + v  ->  x_packed[q, u, v] (lane-dense slabs).
    # Under jit the pad + reshape + transpose fuse into a single layout pass.
    x_pad = jnp.zeros((padded, N_QUBITS), jnp.float32).at[:batch].set(
        x.astype(jnp.float32))
    x_packed = jnp.transpose(x_pad.reshape(ROW_PACK, cols, N_QUBITS), (2, 0, 1))

    enc_cs = _encoder_cos_sin(encoder_params)

    out_packed = _qae_packed_call(x_packed, enc_cs, tile_v=tile_v)

    # Unpack: out[i, q] = out_packed[q, u, v] with i = u * cols + v.
    out = jnp.transpose(out_packed, (1, 2, 0)).reshape(padded, N_QUBITS)
    return out[:batch]


qae_forward = jax.jit(_qae_forward_impl)


def _qae_forward_packed_impl(x_packed, encoder_params):
    """Zero-copy entry point for consumers that already hold the qubit-major
    packed layout [N_QUBITS, ROW_PACK, cols] (cols a multiple of 128); returns
    <Z_q> in the same layout with no pack/unpack HBM passes."""
    _, _, cols = x_packed.shape
    tile_v, _, _ = _choose_tiling(cols * ROW_PACK)
    tile_v = min(tile_v, cols)
    return _qae_packed_call(x_packed.astype(jnp.float32),
                            _encoder_cos_sin(encoder_params), tile_v=tile_v)


qae_forward_packed = jax.jit(_qae_forward_packed_impl)


# ---------------------------------------------------------------------------
# Plain-JAX reference (dense state-vector simulation of the same circuit),
# used only to validate the kernel numerically.
# ---------------------------------------------------------------------------
def _ry_generator(n_qubits: int, q: int) -> np.ndarray:
    dim = 1 << n_qubits
    g = np.zeros((dim, dim), dtype=np.float32)
    for s in range(dim):
        if ((s >> q) & 1) == 0:
            t = s | (1 << q)
            g[t, s] = 1.0
            g[s, t] = -1.0
    return g


def qae_reference(x: jnp.ndarray, encoder_params: jnp.ndarray) -> jnp.ndarray:
    batch = x.shape[0]
    angles = jnp.concatenate(
        [x.astype(jnp.float32),
         jnp.broadcast_to(encoder_params.astype(jnp.float32)[None, :],
                          (batch, N_ENC_PARAMS))],
        axis=1)
    gens_t = [jnp.asarray(_ry_generator(N_QUBITS, q).T) for q in range(N_QUBITS)]
    cz = jnp.asarray(_cz_ring_diag(N_QUBITS), dtype=jnp.float32)[None, :]
    zs = np.zeros((DIM, N_QUBITS), np.float32)
    for s in range(DIM):
        for q in range(N_QUBITS):
            zs[s, q] = 1.0 - 2.0 * ((s >> q) & 1)
    zs = jnp.asarray(zs)

    state = jnp.zeros((batch, DIM), jnp.float32).at[:, 0].set(1.0)
    n_gates = (1 + LAYERS) * N_QUBITS
    for g in range(n_gates):
        half = angles[:, g:g + 1] * 0.5
        state = jnp.cos(half) * state + jnp.sin(half) * (state @ gens_t[g % N_QUBITS])
        if g >= N_QUBITS and (g - N_QUBITS) % N_QUBITS == N_QUBITS - 1:
            state = state * cz
    probs = state * state
    return probs @ zs


class QAEModuleJax:
    """JAX port of QAEModule: deterministic encoder params, forward via Pallas."""

    def __init__(self, key):
        # torch.rand(param_cnt) * 2*pi  -> uniform [0, 2*pi)
        self.encoder_params = jax.random.uniform(
            key, (N_ENC_PARAMS,), dtype=jnp.float32,
            minval=0.0, maxval=2.0 * math.pi)
        self.shift = math.pi / 4.0   # only used by the (out-of-scope) backward pass

    def __call__(self, x):
        return qae_forward(x, self.encoder_params)


def _check(out, x, encoder_params):
    assert out.shape == (x.shape[0], N_QUBITS)
    assert out.dtype == jnp.float32
    assert bool(jnp.all(jnp.isfinite(out)))
    assert bool(jnp.all(jnp.abs(out) <= 1.0 + 1e-5))          # Z expectations in [-1, 1]
    ref = jax.block_until_ready(qae_reference(x, encoder_params))
    max_err = float(jnp.max(jnp.abs(out - ref)))
    assert bool(jnp.allclose(out, ref, atol=1e-4, rtol=1e-4)), f"max abs err {max_err}"


if __name__ == "__main__":
    key = jax.random.PRNGKey(0)
    k_param, k_x1, k_x2 = jax.random.split(key, 3)

    module = QAEModuleJax(k_param)

    # Primary small case: batch=8 (single grid step, single lane chunk).
    x_small = jax.random.uniform(k_x1, (8, N_QUBITS), dtype=jnp.float32,
                                 minval=0.0, maxval=math.pi)
    out_small = jax.block_until_ready(module(x_small))
    _check(out_small, x_small, module.encoder_params)

    # Secondary case: batch=5000 exercises batch padding, a multi-step
    # "parallel" grid, and the in-kernel multi-chunk fori_loop path.
    x_big = jax.random.uniform(k_x2, (5000, N_QUBITS), dtype=jnp.float32,
                               minval=0.0, maxval=math.pi)
    out_big = jax.block_until_ready(module(x_big))
    _check(out_big, x_big, module.encoder_params)

    print("KERNEL_OK")
</pallas_src>

<mosaic_0001>
module attributes {stable_mosaic.version = 11 : i64} {
  func.func @_qae_kernel(%arg0: i32, %arg1: memref<4x8x128xf32, #tpu.memory_space<vmem>>, %arg2: memref<2x8xf32, #tpu.memory_space<smem>>, %arg3: memref<4x8x128xf32, #tpu.memory_space<vmem>>) attributes {dimension_semantics = [#tpu.dimension_semantics<parallel>], iteration_bounds = array<i64: 1>, scalar_prefetch = 0 : i64, scratch_operands = 0 : i64, tpu.core_type = #tpu.core_type<tc>, window_params = [{transform_indices = @transform_0, window_bounds = array<i64: 4, 8, 128>}, {transform_indices = @transform_1, window_bounds = array<i64: 2, 8>}, {transform_indices = @transform_2, window_bounds = array<i64: 4, 8, 128>}]} {
    %c0 = arith.constant 0 : index
    %c0_0 = arith.constant 0 : index
    %0 = memref.load %arg2[%c0, %c0_0] : memref<2x8xf32, #tpu.memory_space<smem>>
    %c0_1 = arith.constant 0 : index
    %c1 = arith.constant 1 : index
    %1 = memref.load %arg2[%c0_1, %c1] : memref<2x8xf32, #tpu.memory_space<smem>>
    %c0_2 = arith.constant 0 : index
    %c2 = arith.constant 2 : index
    %2 = memref.load %arg2[%c0_2, %c2] : memref<2x8xf32, #tpu.memory_space<smem>>
    %c0_3 = arith.constant 0 : index
    %c3 = arith.constant 3 : index
    %3 = memref.load %arg2[%c0_3, %c3] : memref<2x8xf32, #tpu.memory_space<smem>>
    %c0_4 = arith.constant 0 : index
    %c4 = arith.constant 4 : index
    %4 = memref.load %arg2[%c0_4, %c4] : memref<2x8xf32, #tpu.memory_space<smem>>
    %c0_5 = arith.constant 0 : index
    %c5 = arith.constant 5 : index
    %5 = memref.load %arg2[%c0_5, %c5] : memref<2x8xf32, #tpu.memory_space<smem>>
    %c0_6 = arith.constant 0 : index
    %c6 = arith.constant 6 : index
    %6 = memref.load %arg2[%c0_6, %c6] : memref<2x8xf32, #tpu.memory_space<smem>>
    %c0_7 = arith.constant 0 : index
    %c7 = arith.constant 7 : index
    %7 = memref.load %arg2[%c0_7, %c7] : memref<2x8xf32, #tpu.memory_space<smem>>
    %c1_8 = arith.constant 1 : index
    %c0_9 = arith.constant 0 : index
    %8 = memref.load %arg2[%c1_8, %c0_9] : memref<2x8xf32, #tpu.memory_space<smem>>
    %c1_10 = arith.constant 1 : index
    %c1_11 = arith.constant 1 : index
    %9 = memref.load %arg2[%c1_10, %c1_11] : memref<2x8xf32, #tpu.memory_space<smem>>
    %c1_12 = arith.constant 1 : index
    %c2_13 = arith.constant 2 : index
    %10 = memref.load %arg2[%c1_12, %c2_13] : memref<2x8xf32, #tpu.memory_space<smem>>
    %c1_14 = arith.constant 1 : index
    %c3_15 = arith.constant 3 : index
    %11 = memref.load %arg2[%c1_14, %c3_15] : memref<2x8xf32, #tpu.memory_space<smem>>
    %c1_16 = arith.constant 1 : index
    %c4_17 = arith.constant 4 : index
    %12 = memref.load %arg2[%c1_16, %c4_17] : memref<2x8xf32, #tpu.memory_space<smem>>
    %c1_18 = arith.constant 1 : index
    %c5_19 = arith.constant 5 : index
    %13 = memref.load %arg2[%c1_18, %c5_19] : memref<2x8xf32, #tpu.memory_space<smem>>
    %c1_20 = arith.constant 1 : index
    %c6_21 = arith.constant 6 : index
    %14 = memref.load %arg2[%c1_20, %c6_21] : memref<2x8xf32, #tpu.memory_space<smem>>
    %c1_22 = arith.constant 1 : index
    %c7_23 = arith.constant 7 : index
    %15 = memref.load %arg2[%c1_22, %c7_23] : memref<2x8xf32, #tpu.memory_space<smem>>
    %c0_24 = arith.constant 0 : index
    %c0_25 = arith.constant 0 : index
    %c0_26 = arith.constant 0 : index
    %16 = vector.load %arg1[%c0_24, %c0_25, %c0_26] : memref<4x8x128xf32, #tpu.memory_space<vmem>>, vector<4x8x128xf32>
    %cst = arith.constant 5.000000e-01 : f32
    %17 = vector.broadcast %cst : f32 to vector<4x8x128xf32>
    %18 = arith.mulf %16, %17 : vector<4x8x128xf32>
    %19 = math.cos %18 : vector<4x8x128xf32>
    %20 = math.sin %18 : vector<4x8x128xf32>
    %21 = vector.extract_strided_slice %19 {offsets = [0, 0, 0], sizes = [1, 8, 128], strides = [1, 1, 1]} : vector<4x8x128xf32> to vector<1x8x128xf32>
    %22 = vector.shape_cast %21 : vector<1x8x128xf32> to vector<8x128xf32>
    %23 = vector.extract_strided_slice %20 {offsets = [0, 0, 0], sizes = [1, 8, 128], strides = [1, 1, 1]} : vector<4x8x128xf32> to vector<1x8x128xf32>
    %24 = vector.shape_cast %23 : vector<1x8x128xf32> to vector<8x128xf32>
    %25 = vector.extract_strided_slice %19 {offsets = [1, 0, 0], sizes = [1, 8, 128], strides = [1, 1, 1]} : vector<4x8x128xf32> to vector<1x8x128xf32>
    %26 = vector.shape_cast %25 : vector<1x8x128xf32> to vector<8x128xf32>
    %27 = vector.extract_strided_slice %20 {offsets = [1, 0, 0], sizes = [1, 8, 128], strides = [1, 1, 1]} : vector<4x8x128xf32> to vector<1x8x128xf32>
    %28 = vector.shape_cast %27 : vector<1x8x128xf32> to vector<8x128xf32>
    %29 = vector.extract_strided_slice %19 {offsets = [2, 0, 0], sizes = [1, 8, 128], strides = [1, 1, 1]} : vector<4x8x128xf32> to vector<1x8x128xf32>
    %30 = vector.shape_cast %29 : vector<1x8x128xf32> to vector<8x128xf32>
    %31 = vector.extract_strided_slice %20 {offsets = [2, 0, 0], sizes = [1, 8, 128], strides = [1, 1, 1]} : vector<4x8x128xf32> to vector<1x8x128xf32>
    %32 = vector.shape_cast %31 : vector<1x8x128xf32> to vector<8x128xf32>
    %33 = vector.extract_strided_slice %19 {offsets = [3, 0, 0], sizes = [1, 8, 128], strides = [1, 1, 1]} : vector<4x8x128xf32> to vector<1x8x128xf32>
    %34 = vector.shape_cast %33 : vector<1x8x128xf32> to vector<8x128xf32>
    %35 = vector.extract_strided_slice %20 {offsets = [3, 0, 0], sizes = [1, 8, 128], strides = [1, 1, 1]} : vector<4x8x128xf32> to vector<1x8x128xf32>
    %36 = vector.shape_cast %35 : vector<1x8x128xf32> to vector<8x128xf32>
    %37 = arith.mulf %22, %26 : vector<8x128xf32>
    %38 = arith.mulf %22, %28 : vector<8x128xf32>
    %39 = arith.mulf %24, %26 : vector<8x128xf32>
    %40 = arith.mulf %24, %28 : vector<8x128xf32>
    %41 = arith.mulf %30, %34 : vector<8x128xf32>
    %42 = arith.mulf %30, %36 : vector<8x128xf32>
    %43 = arith.mulf %32, %34 : vector<8x128xf32>
    %44 = arith.mulf %32, %36 : vector<8x128xf32>
    %45 = arith.mulf %37, %41 : vector<8x128xf32>
    %46 = arith.mulf %39, %41 : vector<8x128xf32>
    %47 = arith.mulf %38, %41 : vector<8x128xf32>
    %48 = arith.mulf %40, %41 : vector<8x128xf32>
    %49 = arith.mulf %37, %43 : vector<8x128xf32>
    %50 = arith.mulf %39, %43 : vector<8x128xf32>
    %51 = arith.mulf %38, %43 : vector<8x128xf32>
    %52 = arith.mulf %40, %43 : vector<8x128xf32>
    %53 = arith.mulf %37, %42 : vector<8x128xf32>
    %54 = arith.mulf %39, %42 : vector<8x128xf32>
    %55 = arith.mulf %38, %42 : vector<8x128xf32>
    %56 = arith.mulf %40, %42 : vector<8x128xf32>
    %57 = arith.mulf %37, %44 : vector<8x128xf32>
    %58 = arith.mulf %39, %44 : vector<8x128xf32>
    %59 = arith.mulf %38, %44 : vector<8x128xf32>
    %60 = arith.mulf %40, %44 : vector<8x128xf32>
    %61 = vector.broadcast %0 : f32 to vector<8x128xf32>
    %62 = vector.broadcast %8 : f32 to vector<8x128xf32>
    %63 = arith.mulf %62, %46 : vector<8x128xf32>
    %64 = arith.mulf %62, %45 : vector<8x128xf32>
    %65 = arith.mulf %61, %45 : vector<8x128xf32>
    %66 = arith.subf %65, %63 : vector<8x128xf32>
    %67 = arith.mulf %61, %46 : vector<8x128xf32>
    %68 = arith.addf %67, %64 : vector<8x128xf32>
    %69 = arith.mulf %62, %48 : vector<8x128xf32>
    %70 = arith.mulf %62, %47 : vector<8x128xf32>
    %71 = arith.mulf %61, %47 : vector<8x128xf32>
    %72 = arith.subf %71, %69 : vector<8x128xf32>
    %73 = arith.mulf %61, %48 : vector<8x128xf32>
    %74 = arith.addf %73, %70 : vector<8x128xf32>
    %75 = arith.mulf %62, %50 : vector<8x128xf32>
    %76 = arith.mulf %62, %49 : vector<8x128xf32>
    %77 = arith.mulf %61, %49 : vector<8x128xf32>
    %78 = arith.subf %77, %75 : vector<8x128xf32>
    %79 = arith.mulf %61, %50 : vector<8x128xf32>
    %80 = arith.addf %79, %76 : vector<8x128xf32>
    %81 = arith.mulf %62, %52 : vector<8x128xf32>
    %82 = arith.mulf %62, %51 : vector<8x128xf32>
    %83 = arith.mulf %61, %51 : vector<8x128xf32>
    %84 = arith.subf %83, %81 : vector<8x128xf32>
    %85 = arith.mulf %61, %52 : vector<8x128xf32>
    %86 = arith.addf %85, %82 : vector<8x128xf32>
    %87 = arith.mulf %62, %54 : vector<8x128xf32>
    %88 = arith.mulf %62, %53 : vector<8x128xf32>
    %89 = arith.mulf %61, %53 : vector<8x128xf32>
    %90 = arith.subf %89, %87 : vector<8x128xf32>
    %91 = arith.mulf %61, %54 : vector<8x128xf32>
    %92 = arith.addf %91, %88 : vector<8x128xf32>
    %93 = arith.mulf %62, %56 : vector<8x128xf32>
    %94 = arith.mulf %62, %55 : vector<8x128xf32>
    %95 = arith.mulf %61, %55 : vector<8x128xf32>
    %96 = arith.subf %95, %93 : vector<8x128xf32>
    %97 = arith.mulf %61, %56 : vector<8x128xf32>
    %98 = arith.addf %97, %94 : vector<8x128xf32>
    %99 = arith.mulf %62, %58 : vector<8x128xf32>
    %100 = arith.mulf %62, %57 : vector<8x128xf32>
    %101 = arith.mulf %61, %57 : vector<8x128xf32>
    %102 = arith.subf %101, %99 : vector<8x128xf32>
    %103 = arith.mulf %61, %58 : vector<8x128xf32>
    %104 = arith.addf %103, %100 : vector<8x128xf32>
    %105 = arith.mulf %62, %60 : vector<8x128xf32>
    %106 = arith.mulf %62, %59 : vector<8x128xf32>
    %107 = arith.mulf %61, %59 : vector<8x128xf32>
    %108 = arith.subf %107, %105 : vector<8x128xf32>
    %109 = arith.mulf %61, %60 : vector<8x128xf32>
    %110 = arith.addf %109, %106 : vector<8x128xf32>
    %111 = vector.broadcast %1 : f32 to vector<8x128xf32>
    %112 = vector.broadcast %9 : f32 to vector<8x128xf32>
    %113 = arith.mulf %112, %72 : vector<8x128xf32>
    %114 = arith.mulf %112, %66 : vector<8x128xf32>
    %115 = arith.mulf %111, %66 : vector<8x128xf32>
    %116 = arith.subf %115, %113 : vector<8x128xf32>
    %117 = arith.mulf %111, %72 : vector<8x128xf32>
    %118 = arith.addf %117, %114 : vector<8x128xf32>
    %119 = arith.mulf %112, %74 : vector<8x128xf32>
    %120 = arith.mulf %112, %68 : vector<8x128xf32>
    %121 = arith.mulf %111, %68 : vector<8x128xf32>
    %122 = arith.subf %121, %119 : vector<8x128xf32>
    %123 = arith.mulf %111, %74 : vector<8x128xf32>
    %124 = arith.addf %123, %120 : vector<8x128xf32>
    %125 = arith.mulf %112, %84 : vector<8x128xf32>
    %126 = arith.mulf %112, %78 : vector<8x128xf32>
    %127 = arith.mulf %111, %78 : vector<8x128xf32>
    %128 = arith.subf %127, %125 : vector<8x128xf32>
    %129 = arith.mulf %111, %84 : vector<8x128xf32>
    %130 = arith.addf %129, %126 : vector<8x128xf32>
    %131 = arith.mulf %112, %86 : vector<8x128xf32>
    %132 = arith.mulf %112, %80 : vector<8x128xf32>
    %133 = arith.mulf %111, %80 : vector<8x128xf32>
    %134 = arith.subf %133, %131 : vector<8x128xf32>
    %135 = arith.mulf %111, %86 : vector<8x128xf32>
    %136 = arith.addf %135, %132 : vector<8x128xf32>
    %137 = arith.mulf %112, %96 : vector<8x128xf32>
    %138 = arith.mulf %112, %90 : vector<8x128xf32>
    %139 = arith.mulf %111, %90 : vector<8x128xf32>
    %140 = arith.subf %139, %137 : vector<8x128xf32>
    %141 = arith.mulf %111, %96 : vector<8x128xf32>
    %142 = arith.addf %141, %138 : vector<8x128xf32>
    %143 = arith.mulf %112, %98 : vector<8x128xf32>
    %144 = arith.mulf %112, %92 : vector<8x128xf32>
    %145 = arith.mulf %111, %92 : vector<8x128xf32>
    %146 = arith.subf %145, %143 : vector<8x128xf32>
    %147 = arith.mulf %111, %98 : vector<8x128xf32>
    %148 = arith.addf %147, %144 : vector<8x128xf32>
    %149 = arith.mulf %112, %108 : vector<8x128xf32>
    %150 = arith.mulf %112, %102 : vector<8x128xf32>
    %151 = arith.mulf %111, %102 : vector<8x128xf32>
    %152 = arith.subf %151, %149 : vector<8x128xf32>
    %153 = arith.mulf %111, %108 : vector<8x128xf32>
    %154 = arith.addf %153, %150 : vector<8x128xf32>
    %155 = arith.mulf %112, %110 : vector<8x128xf32>
    %156 = arith.mulf %112, %104 : vector<8x128xf32>
    %157 = arith.mulf %111, %104 : vector<8x128xf32>
    %158 = arith.subf %157, %155 : vector<8x128xf32>
    %159 = arith.mulf %111, %110 : vector<8x128xf32>
    %160 = arith.addf %159, %156 : vector<8x128xf32>
    %161 = vector.broadcast %2 : f32 to vector<8x128xf32>
    %162 = vector.broadcast %10 : f32 to vector<8x128xf32>
    %163 = arith.mulf %162, %128 : vector<8x128xf32>
    %164 = arith.mulf %162, %116 : vector<8x128xf32>
    %165 = arith.mulf %161, %116 : vector<8x128xf32>
    %166 = arith.subf %165, %163 : vector<8x128xf32>
    %167 = arith.mulf %161, %128 : vector<8x128xf32>
    %168 = arith.addf %167, %164 : vector<8x128xf32>
    %169 = arith.mulf %162, %134 : vector<8x128xf32>
    %170 = arith.mulf %162, %122 : vector<8x128xf32>
    %171 = arith.mulf %161, %122 : vector<8x128xf32>
    %172 = arith.subf %171, %169 : vector<8x128xf32>
    %173 = arith.mulf %161, %134 : vector<8x128xf32>
    %174 = arith.addf %173, %170 : vector<8x128xf32>
    %175 = arith.mulf %162, %130 : vector<8x128xf32>
    %176 = arith.mulf %162, %118 : vector<8x128xf32>
    %177 = arith.mulf %161, %118 : vector<8x128xf32>
    %178 = arith.subf %177, %175 : vector<8x128xf32>
    %179 = arith.mulf %161, %130 : vector<8x128xf32>
    %180 = arith.addf %179, %176 : vector<8x128xf32>
    %181 = arith.mulf %162, %136 : vector<8x128xf32>
    %182 = arith.mulf %162, %124 : vector<8x128xf32>
    %183 = arith.mulf %161, %124 : vector<8x128xf32>
    %184 = arith.subf %183, %181 : vector<8x128xf32>
    %185 = arith.mulf %161, %136 : vector<8x128xf32>
    %186 = arith.addf %185, %182 : vector<8x128xf32>
    %187 = arith.mulf %162, %152 : vector<8x128xf32>
    %188 = arith.mulf %162, %140 : vector<8x128xf32>
    %189 = arith.mulf %161, %140 : vector<8x128xf32>
    %190 = arith.subf %189, %187 : vector<8x128xf32>
    %191 = arith.mulf %161, %152 : vector<8x128xf32>
    %192 = arith.addf %191, %188 : vector<8x128xf32>
    %193 = arith.mulf %162, %158 : vector<8x128xf32>
    %194 = arith.mulf %162, %146 : vector<8x128xf32>
    %195 = arith.mulf %161, %146 : vector<8x128xf32>
    %196 = arith.subf %195, %193 : vector<8x128xf32>
    %197 = arith.mulf %161, %158 : vector<8x128xf32>
    %198 = arith.addf %197, %194 : vector<8x128xf32>
    %199 = arith.mulf %162, %154 : vector<8x128xf32>
    %200 = arith.mulf %162, %142 : vector<8x128xf32>
    %201 = arith.mulf %161, %142 : vector<8x128xf32>
    %202 = arith.subf %201, %199 : vector<8x128xf32>
    %203 = arith.mulf %161, %154 : vector<8x128xf32>
    %204 = arith.addf %203, %200 : vector<8x128xf32>
    %205 = arith.mulf %162, %160 : vector<8x128xf32>
    %206 = arith.mulf %162, %148 : vector<8x128xf32>
    %207 = arith.mulf %161, %148 : vector<8x128xf32>
    %208 = arith.subf %207, %205 : vector<8x128xf32>
    %209 = arith.mulf %161, %160 : vector<8x128xf32>
    %210 = arith.addf %209, %206 : vector<8x128xf32>
    %211 = vector.broadcast %3 : f32 to vector<8x128xf32>
    %212 = vector.broadcast %11 : f32 to vector<8x128xf32>
    %213 = arith.mulf %212, %190 : vector<8x128xf32>
    %214 = arith.mulf %212, %166 : vector<8x128xf32>
    %215 = arith.mulf %211, %166 : vector<8x128xf32>
    %216 = arith.subf %215, %213 : vector<8x128xf32>
    %217 = arith.mulf %211, %190 : vector<8x128xf32>
    %218 = arith.addf %217, %214 : vector<8x128xf32>
    %219 = arith.mulf %212, %196 : vector<8x128xf32>
    %220 = arith.mulf %212, %172 : vector<8x128xf32>
    %221 = arith.mulf %211, %172 : vector<8x128xf32>
    %222 = arith.subf %221, %219 : vector<8x128xf32>
    %223 = arith.mulf %211, %196 : vector<8x128xf32>
    %224 = arith.addf %223, %220 : vector<8x128xf32>
    %225 = arith.mulf %212, %202 : vector<8x128xf32>
    %226 = arith.mulf %212, %178 : vector<8x128xf32>
    %227 = arith.mulf %211, %178 : vector<8x128xf32>
    %228 = arith.subf %227, %225 : vector<8x128xf32>
    %229 = arith.mulf %211, %202 : vector<8x128xf32>
    %230 = arith.addf %229, %226 : vector<8x128xf32>
    %231 = arith.mulf %212, %208 : vector<8x128xf32>
    %232 = arith.mulf %212, %184 : vector<8x128xf32>
    %233 = arith.mulf %211, %184 : vector<8x128xf32>
    %234 = arith.subf %233, %231 : vector<8x128xf32>
    %235 = arith.mulf %211, %208 : vector<8x128xf32>
    %236 = arith.addf %235, %232 : vector<8x128xf32>
    %237 = arith.mulf %212, %192 : vector<8x128xf32>
    %238 = arith.mulf %212, %168 : vector<8x128xf32>
    %239 = arith.mulf %211, %168 : vector<8x128xf32>
    %240 = arith.subf %239, %237 : vector<8x128xf32>
    %241 = arith.mulf %211, %192 : vector<8x128xf32>
    %242 = arith.addf %241, %238 : vector<8x128xf32>
    %243 = arith.mulf %212, %198 : vector<8x128xf32>
    %244 = arith.mulf %212, %174 : vector<8x128xf32>
    %245 = arith.mulf %211, %174 : vector<8x128xf32>
    %246 = arith.subf %245, %243 : vector<8x128xf32>
    %247 = arith.mulf %211, %198 : vector<8x128xf32>
    %248 = arith.addf %247, %244 : vector<8x128xf32>
    %249 = arith.mulf %212, %204 : vector<8x128xf32>
    %250 = arith.mulf %212, %180 : vector<8x128xf32>
    %251 = arith.mulf %211, %180 : vector<8x128xf32>
    %252 = arith.subf %251, %249 : vector<8x128xf32>
    %253 = arith.mulf %211, %204 : vector<8x128xf32>
    %254 = arith.addf %253, %250 : vector<8x128xf32>
    %255 = arith.mulf %212, %210 : vector<8x128xf32>
    %256 = arith.mulf %212, %186 : vector<8x128xf32>
    %257 = arith.mulf %211, %186 : vector<8x128xf32>
    %258 = arith.subf %257, %255 : vector<8x128xf32>
    %259 = arith.mulf %211, %210 : vector<8x128xf32>
    %260 = arith.addf %259, %256 : vector<8x128xf32>
    %261 = vector.broadcast %4 : f32 to vector<8x128xf32>
    %262 = vector.broadcast %12 : f32 to vector<8x128xf32>
    %263 = arith.mulf %262, %222 : vector<8x128xf32>
    %264 = arith.mulf %262, %216 : vector<8x128xf32>
    %265 = arith.mulf %261, %216 : vector<8x128xf32>
    %266 = arith.subf %265, %263 : vector<8x128xf32>
    %267 = arith.mulf %261, %222 : vector<8x128xf32>
    %268 = arith.addf %267, %264 : vector<8x128xf32>
    %269 = arith.mulf %262, %234 : vector<8x128xf32>
    %270 = arith.mulf %262, %228 : vector<8x128xf32>
    %271 = arith.mulf %261, %228 : vector<8x128xf32>
    %272 = arith.addf %271, %269 : vector<8x128xf32>
    %273 = arith.mulf %261, %234 : vector<8x128xf32>
    %274 = arith.subf %273, %270 : vector<8x128xf32>
    %275 = arith.mulf %262, %246 : vector<8x128xf32>
    %276 = arith.mulf %262, %240 : vector<8x128xf32>
    %277 = arith.mulf %261, %240 : vector<8x128xf32>
    %278 = arith.subf %277, %275 : vector<8x128xf32>
    %279 = arith.mulf %261, %246 : vector<8x128xf32>
    %280 = arith.addf %279, %276 : vector<8x128xf32>
    %281 = arith.mulf %262, %258 : vector<8x128xf32>
    %282 = arith.mulf %262, %252 : vector<8x128xf32>
    %283 = arith.mulf %261, %252 : vector<8x128xf32>
    %284 = arith.addf %283, %281 : vector<8x128xf32>
    %285 = arith.mulf %261, %258 : vector<8x128xf32>
    %286 = arith.subf %285, %282 : vector<8x128xf32>
    %287 = arith.mulf %262, %224 : vector<8x128xf32>
    %288 = arith.mulf %262, %218 : vector<8x128xf32>
    %289 = arith.mulf %261, %218 : vector<8x128xf32>
    %290 = arith.addf %289, %287 : vector<8x128xf32>
    %291 = arith.mulf %261, %224 : vector<8x128xf32>
    %292 = arith.subf %291, %288 : vector<8x128xf32>
    %293 = arith.mulf %262, %236 : vector<8x128xf32>
    %294 = arith.mulf %262, %230 : vector<8x128xf32>
    %295 = arith.mulf %261, %230 : vector<8x128xf32>
    %296 = arith.subf %295, %293 : vector<8x128xf32>
    %297 = arith.mulf %261, %236 : vector<8x128xf32>
    %298 = arith.addf %297, %294 : vector<8x128xf32>
    %299 = arith.mulf %262, %248 : vector<8x128xf32>
    %300 = arith.mulf %262, %242 : vector<8x128xf32>
    %301 = arith.mulf %261, %242 : vector<8x128xf32>
    %302 = arith.addf %301, %299 : vector<8x128xf32>
    %303 = arith.mulf %261, %248 : vector<8x128xf32>
    %304 = arith.subf %303, %300 : vector<8x128xf32>
    %305 = arith.mulf %262, %260 : vector<8x128xf32>
    %306 = arith.mulf %262, %254 : vector<8x128xf32>
    %307 = arith.mulf %261, %254 : vector<8x128xf32>
    %308 = arith.subf %307, %305 : vector<8x128xf32>
    %309 = arith.mulf %261, %260 : vector<8x128xf32>
    %310 = arith.addf %309, %306 : vector<8x128xf32>
    %311 = vector.broadcast %5 : f32 to vector<8x128xf32>
    %312 = vector.broadcast %13 : f32 to vector<8x128xf32>
    %313 = arith.mulf %312, %272 : vector<8x128xf32>
    %314 = arith.mulf %312, %266 : vector<8x128xf32>
    %315 = arith.mulf %311, %266 : vector<8x128xf32>
    %316 = arith.subf %315, %313 : vector<8x128xf32>
    %317 = arith.mulf %311, %272 : vector<8x128xf32>
    %318 = arith.addf %317, %314 : vector<8x128xf32>
    %319 = arith.mulf %312, %274 : vector<8x128xf32>
    %320 = arith.mulf %312, %268 : vector<8x128xf32>
    %321 = arith.mulf %311, %268 : vector<8x128xf32>
    %322 = arith.addf %321, %319 : vector<8x128xf32>
    %323 = arith.mulf %311, %274 : vector<8x128xf32>
    %324 = arith.subf %323, %320 : vector<8x128xf32>
    %325 = arith.mulf %312, %284 : vector<8x128xf32>
    %326 = arith.mulf %312, %278 : vector<8x128xf32>
    %327 = arith.mulf %311, %278 : vector<8x128xf32>
    %328 = arith.addf %327, %325 : vector<8x128xf32>
    %329 = arith.mulf %311, %284 : vector<8x128xf32>
    %330 = arith.subf %329, %326 : vector<8x128xf32>
    %331 = arith.mulf %312, %286 : vector<8x128xf32>
    %332 = arith.mulf %312, %280 : vector<8x128xf32>
    %333 = arith.mulf %311, %280 : vector<8x128xf32>
    %334 = arith.subf %333, %331 : vector<8x128xf32>
    %335 = arith.mulf %311, %286 : vector<8x128xf32>
    %336 = arith.addf %335, %332 : vector<8x128xf32>
    %337 = arith.mulf %312, %296 : vector<8x128xf32>
    %338 = arith.mulf %312, %290 : vector<8x128xf32>
    %339 = arith.mulf %311, %290 : vector<8x128xf32>
    %340 = arith.subf %339, %337 : vector<8x128xf32>
    %341 = arith.mulf %311, %296 : vector<8x128xf32>
    %342 = arith.addf %341, %338 : vector<8x128xf32>
    %343 = arith.mulf %312, %298 : vector<8x128xf32>
    %344 = arith.mulf %312, %292 : vector<8x128xf32>
    %345 = arith.mulf %311, %292 : vector<8x128xf32>
    %346 = arith.addf %345, %343 : vector<8x128xf32>
    %347 = arith.mulf %311, %298 : vector<8x128xf32>
    %348 = arith.subf %347, %344 : vector<8x128xf32>
    %349 = arith.mulf %312, %308 : vector<8x128xf32>
    %350 = arith.mulf %312, %302 : vector<8x128xf32>
    %351 = arith.mulf %311, %302 : vector<8x128xf32>
    %352 = arith.addf %351, %349 : vector<8x128xf32>
    %353 = arith.mulf %311, %308 : vector<8x128xf32>
    %354 = arith.subf %353, %350 : vector<8x128xf32>
    %355 = arith.mulf %312, %310 : vector<8x128xf32>
    %356 = arith.mulf %312, %304 : vector<8x128xf32>
    %357 = arith.mulf %311, %304 : vector<8x128xf32>
    %358 = arith.subf %357, %355 : vector<8x128xf32>
    %359 = arith.mulf %311, %310 : vector<8x128xf32>
    %360 = arith.addf %359, %356 : vector<8x128xf32>
    %361 = vector.broadcast %6 : f32 to vector<8x128xf32>
    %362 = vector.broadcast %14 : f32 to vector<8x128xf32>
    %363 = arith.mulf %362, %328 : vector<8x128xf32>
    %364 = arith.mulf %362, %316 : vector<8x128xf32>
    %365 = arith.mulf %361, %316 : vector<8x128xf32>
    %366 = arith.subf %365, %363 : vector<8x128xf32>
    %367 = arith.mulf %361, %328 : vector<8x128xf32>
    %368 = arith.addf %367, %364 : vector<8x128xf32>
    %369 = arith.mulf %362, %334 : vector<8x128xf32>
    %370 = arith.mulf %362, %322 : vector<8x128xf32>
    %371 = arith.mulf %361, %322 : vector<8x128xf32>
    %372 = arith.subf %371, %369 : vector<8x128xf32>
    %373 = arith.mulf %361, %334 : vector<8x128xf32>
    %374 = arith.addf %373, %370 : vector<8x128xf32>
    %375 = arith.mulf %362, %330 : vector<8x128xf32>
    %376 = arith.mulf %362, %318 : vector<8x128xf32>
    %377 = arith.mulf %361, %318 : vector<8x128xf32>
    %378 = arith.addf %377, %375 : vector<8x128xf32>
    %379 = arith.mulf %361, %330 : vector<8x128xf32>
    %380 = arith.subf %379, %376 : vector<8x128xf32>
    %381 = arith.mulf %362, %336 : vector<8x128xf32>
    %382 = arith.mulf %362, %324 : vector<8x128xf32>
    %383 = arith.mulf %361, %324 : vector<8x128xf32>
    %384 = arith.addf %383, %381 : vector<8x128xf32>
    %385 = arith.mulf %361, %336 : vector<8x128xf32>
    %386 = arith.subf %385, %382 : vector<8x128xf32>
    %387 = arith.mulf %362, %352 : vector<8x128xf32>
    %388 = arith.mulf %362, %340 : vector<8x128xf32>
    %389 = arith.mulf %361, %340 : vector<8x128xf32>
    %390 = arith.addf %389, %387 : vector<8x128xf32>
    %391 = arith.mulf %361, %352 : vector<8x128xf32>
    %392 = arith.subf %391, %388 : vector<8x128xf32>
    %393 = arith.mulf %362, %358 : vector<8x128xf32>
    %394 = arith.mulf %362, %346 : vector<8x128xf32>
    %395 = arith.mulf %361, %346 : vector<8x128xf32>
    %396 = arith.addf %395, %393 : vector<8x128xf32>
    %397 = arith.mulf %361, %358 : vector<8x128xf32>
    %398 = arith.subf %397, %394 : vector<8x128xf32>
    %399 = arith.mulf %362, %354 : vector<8x128xf32>
    %400 = arith.mulf %362, %342 : vector<8x128xf32>
    %401 = arith.mulf %361, %342 : vector<8x128xf32>
    %402 = arith.subf %401, %399 : vector<8x128xf32>
    %403 = arith.mulf %361, %354 : vector<8x128xf32>
    %404 = arith.addf %403, %400 : vector<8x128xf32>
    %405 = arith.mulf %362, %360 : vector<8x128xf32>
    %406 = arith.mulf %362, %348 : vector<8x128xf32>
    %407 = arith.mulf %361, %348 : vector<8x128xf32>
    %408 = arith.subf %407, %405 : vector<8x128xf32>
    %409 = arith.mulf %361, %360 : vector<8x128xf32>
    %410 = arith.addf %409, %406 : vector<8x128xf32>
    %411 = vector.broadcast %7 : f32 to vector<8x128xf32>
    %412 = vector.broadcast %15 : f32 to vector<8x128xf32>
    %413 = arith.mulf %412, %390 : vector<8x128xf32>
    %414 = arith.mulf %412, %366 : vector<8x128xf32>
    %415 = arith.mulf %411, %366 : vector<8x128xf32>
    %416 = arith.subf %415, %413 : vector<8x128xf32>
    %417 = arith.mulf %411, %390 : vector<8x128xf32>
    %418 = arith.addf %417, %414 : vector<8x128xf32>
    %419 = arith.mulf %412, %396 : vector<8x128xf32>
    %420 = arith.mulf %412, %372 : vector<8x128xf32>
    %421 = arith.mulf %411, %372 : vector<8x128xf32>
    %422 = arith.addf %421, %419 : vector<8x128xf32>
    %423 = arith.mulf %411, %396 : vector<8x128xf32>
    %424 = arith.subf %423, %420 : vector<8x128xf32>
    %425 = arith.mulf %412, %402 : vector<8x128xf32>
    %426 = arith.mulf %412, %378 : vector<8x128xf32>
    %427 = arith.mulf %411, %378 : vector<8x128xf32>
    %428 = arith.subf %427, %425 : vector<8x128xf32>
    %429 = arith.mulf %411, %402 : vector<8x128xf32>
    %430 = arith.addf %429, %426 : vector<8x128xf32>
    %431 = arith.mulf %412, %408 : vector<8x128xf32>
    %432 = arith.mulf %412, %384 : vector<8x128xf32>
    %433 = arith.mulf %411, %384 : vector<8x128xf32>
    %434 = arith.addf %433, %431 : vector<8x128xf32>
    %435 = arith.mulf %411, %408 : vector<8x128xf32>
    %436 = arith.subf %435, %432 : vector<8x128xf32>
    %437 = arith.mulf %412, %392 : vector<8x128xf32>
    %438 = arith.mulf %412, %368 : vector<8x128xf32>
    %439 = arith.mulf %411, %368 : vector<8x128xf32>
    %440 = arith.addf %439, %437 : vector<8x128xf32>
    %441 = arith.mulf %411, %392 : vector<8x128xf32>
    %442 = arith.subf %441, %438 : vector<8x128xf32>
    %443 = arith.mulf %412, %398 : vector<8x128xf32>
    %444 = arith.mulf %412, %374 : vector<8x128xf32>
    %445 = arith.mulf %411, %374 : vector<8x128xf32>
    %446 = arith.subf %445, %443 : vector<8x128xf32>
    %447 = arith.mulf %411, %398 : vector<8x128xf32>
    %448 = arith.addf %447, %444 : vector<8x128xf32>
    %449 = arith.mulf %412, %404 : vector<8x128xf32>
    %450 = arith.mulf %412, %380 : vector<8x128xf32>
    %451 = arith.mulf %411, %380 : vector<8x128xf32>
    %452 = arith.addf %451, %449 : vector<8x128xf32>
    %453 = arith.mulf %411, %404 : vector<8x128xf32>
    %454 = arith.subf %453, %450 : vector<8x128xf32>
    %455 = arith.mulf %412, %410 : vector<8x128xf32>
    %456 = arith.mulf %412, %386 : vector<8x128xf32>
    %457 = arith.mulf %411, %386 : vector<8x128xf32>
    %458 = arith.subf %457, %455 : vector<8x128xf32>
    %459 = arith.mulf %411, %410 : vector<8x128xf32>
    %460 = arith.addf %459, %456 : vector<8x128xf32>
    %461 = arith.mulf %416, %416 : vector<8x128xf32>
    %462 = arith.mulf %422, %422 : vector<8x128xf32>
    %463 = arith.mulf %428, %428 : vector<8x128xf32>
    %464 = arith.mulf %434, %434 : vector<8x128xf32>
    %465 = arith.mulf %440, %440 : vector<8x128xf32>
    %466 = arith.mulf %446, %446 : vector<8x128xf32>
    %467 = arith.mulf %452, %452 : vector<8x128xf32>
    %468 = arith.mulf %458, %458 : vector<8x128xf32>
    %469 = arith.mulf %418, %418 : vector<8x128xf32>
    %470 = arith.mulf %424, %424 : vector<8x128xf32>
    %471 = arith.mulf %430, %430 : vector<8x128xf32>
    %472 = arith.mulf %436, %436 : vector<8x128xf32>
    %473 = arith.mulf %442, %442 : vector<8x128xf32>
    %474 = arith.mulf %448, %448 : vector<8x128xf32>
    %475 = arith.mulf %454, %454 : vector<8x128xf32>
    %476 = arith.mulf %460, %460 : vector<8x128xf32>
    %477 = arith.addf %461, %462 : vector<8x128xf32>
    %478 = arith.addf %463, %464 : vector<8x128xf32>
    %479 = arith.addf %465, %466 : vector<8x128xf32>
    %480 = arith.addf %467, %468 : vector<8x128xf32>
    %481 = arith.addf %469, %470 : vector<8x128xf32>
    %482 = arith.addf %471, %472 : vector<8x128xf32>
    %483 = arith.addf %473, %474 : vector<8x128xf32>
    %484 = arith.addf %475, %476 : vector<8x128xf32>
    %485 = arith.subf %461, %462 : vector<8x128xf32>
    %486 = arith.subf %463, %464 : vector<8x128xf32>
    %487 = arith.subf %465, %466 : vector<8x128xf32>
    %488 = arith.subf %467, %468 : vector<8x128xf32>
    %489 = arith.subf %469, %470 : vector<8x128xf32>
    %490 = arith.subf %471, %472 : vector<8x128xf32>
    %491 = arith.subf %473, %474 : vector<8x128xf32>
    %492 = arith.subf %475, %476 : vector<8x128xf32>
    %493 = arith.addf %485, %486 : vector<8x128xf32>
    %494 = arith.addf %487, %488 : vector<8x128xf32>
    %495 = arith.addf %489, %490 : vector<8x128xf32>
    %496 = arith.addf %491, %492 : vector<8x128xf32>
    %497 = arith.addf %493, %494 : vector<8x128xf32>
    %498 = arith.addf %495, %496 : vector<8x128xf32>
    %499 = arith.addf %497, %498 : vector<8x128xf32>
    %500 = arith.addf %477, %478 : vector<8x128xf32>
    %501 = arith.addf %479, %480 : vector<8x128xf32>
    %502 = arith.addf %481, %482 : vector<8x128xf32>
    %503 = arith.addf %483, %484 : vector<8x128xf32>
    %504 = arith.subf %477, %478 : vector<8x128xf32>
    %505 = arith.subf %479, %480 : vector<8x128xf32>
    %506 = arith.subf %481, %482 : vector<8x128xf32>
    %507 = arith.subf %483, %484 : vector<8x128xf32>
    %508 = arith.addf %504, %505 : vector<8x128xf32>
    %509 = arith.addf %506, %507 : vector<8x128xf32>
    %510 = arith.addf %508, %509 : vector<8x128xf32>
    %511 = arith.addf %500, %501 : vector<8x128xf32>
    %512 = arith.addf %502, %503 : vector<8x128xf32>
    %513 = arith.subf %500, %501 : vector<8x128xf32>
    %514 = arith.subf %502, %503 : vector<8x128xf32>
    %515 = arith.addf %513, %514 : vector<8x128xf32>
    %516 = arith.subf %511, %512 : vector<8x128xf32>
    %c0_27 = arith.constant 0 : index
    %c0_28 = arith.constant 0 : index
    %c0_29 = arith.constant 0 : index
    %517 = vector.load %arg3[%c0_27, %c0_28, %c0_29] : memref<4x8x128xf32, #tpu.memory_space<vmem>>, vector<1x8x128xf32>
    %518 = vector.shape_cast %517 : vector<1x8x128xf32> to vector<8x128xf32>
    %519 = vector.shape_cast %499 : vector<8x128xf32> to vector<1x8x128xf32>
    tpu.vector_store %arg3[%c0_27, %c0_28, %c0_29], %519 {strides = array<i32>} : memref<4x8x128xf32, #tpu.memory_space<vmem>>, vector<1x8x128xf32>,
    %c1_30 = arith.constant 1 : index
    %c0_31 = arith.constant 0 : index
    %c0_32 = arith.constant 0 : index
    %520 = vector.load %arg3[%c1_30, %c0_31, %c0_32] : memref<4x8x128xf32, #tpu.memory_space<vmem>>, vector<1x8x128xf32>
    %521 = vector.shape_cast %520 : vector<1x8x128xf32> to vector<8x128xf32>
    %522 = vector.shape_cast %510 : vector<8x128xf32> to vector<1x8x128xf32>
    tpu.vector_store %arg3[%c1_30, %c0_31, %c0_32], %522 {strides = array<i32>} : memref<4x8x128xf32, #tpu.memory_space<vmem>>, vector<1x8x128xf32>,
    %c2_33 = arith.constant 2 : index
    %c0_34 = arith.constant 0 : index
    %c0_35 = arith.constant 0 : index
    %523 = vector.load %arg3[%c2_33, %c0_34, %c0_35] : memref<4x8x128xf32, #tpu.memory_space<vmem>>, vector<1x8x128xf32>
    %524 = vector.shape_cast %523 : vector<1x8x128xf32> to vector<8x128xf32>
    %525 = vector.shape_cast %515 : vector<8x128xf32> to vector<1x8x128xf32>
    tpu.vector_store %arg3[%c2_33, %c0_34, %c0_35], %525 {strides = array<i32>} : memref<4x8x128xf32, #tpu.memory_space<vmem>>, vector<1x8x128xf32>,
    %c3_36 = arith.constant 3 : index
    %c0_37 = arith.constant 0 : index
    %c0_38 = arith.constant 0 : index
    %526 = vector.load %arg3[%c3_36, %c0_37, %c0_38] : memref<4x8x128xf32, #tpu.memory_space<vmem>>, vector<1x8x128xf32>
    %527 = vector.shape_cast %526 : vector<1x8x128xf32> to vector<8x128xf32>
    %528 = vector.shape_cast %516 : vector<8x128xf32> to vector<1x8x128xf32>
    tpu.vector_store %arg3[%c3_36, %c0_37, %c0_38], %528 {strides = array<i32>} : memref<4x8x128xf32, #tpu.memory_space<vmem>>, vector<1x8x128xf32>,
    return
  }
  func.func @transform_0(%arg0: i32) -> (i32, i32, i32) {
    %c0_i32 = arith.constant 0 : i32
    %c0_i32_0 = arith.constant 0 : i32
    %c0_i32_1 = arith.constant 0 : i32
    return %c0_i32, %c0_i32_0, %arg0 : i32, i32, i32
  }
  func.func @transform_1(%arg0: i32) -> (i32, i32) {
    %c0_i32 = arith.constant 0 : i32
    %c0_i32_0 = arith.constant 0 : i32
    %c0_i32_1 = arith.constant 0 : i32
    return %c0_i32, %c0_i32_0 : i32, i32
  }
  func.func @transform_2(%arg0: i32) -> (i32, i32, i32) {
    %c0_i32 = arith.constant 0 : i32
    %c0_i32_0 = arith.constant 0 : i32
    %c0_i32_1 = arith.constant 0 : i32
    return %c0_i32, %c0_i32_0, %arg0 : i32, i32, i32
  }
}

</mosaic_0001>

<llo_original>
// kernel: _qae_forward_impl.1
$region0: #{_qae_forward_impl.1}
  #allocation0 [shape = 'u32[]', space=smem, size = 0x4, offset = 0x4, fixed_abs, tag = 'smem constant byte address 0x4 - core index']
  #allocation1 [shape = 'u32[144,128]{1,0:T(1,128)}', space=vmem, size = 0x12000, scoped, tag = 'internal scratch']
  %s0 = inlined_call_operand.vmem [shape: f32[4,8,128], index: 0, kind: input, shape index: {}]
  %s1 = inlined_call_operand.vmem [shape: f32[2,8], index: 1, kind: input, shape index: {}]
  %s2 = inlined_call_operand.vmem [shape: f32[4,8,128], index: 2, kind: output, shape index: {}]
  %s3 = sld [smem:[#allocation0]]
  $region22: #{_qae_forward_impl.1} parent=0
    _
  %s5 = ssub.s32 1, %s3
  %s6 = scalar_select 0, %s5, %s3
  $region1: #{_qae_forward_impl.1} parent=0
    #allocation2 [shape = 'u8[1024]{0}', space=smem, size = 0x400, scoped, tag = 'input window, operand 1, single buffered']
    #allocation3 [shape = 's32[1]{0}', space=sflag, size = 0x4, scoped, tag = 'scoped memory for _qae_forward_impl.1']
    %7 = vsyncpa [#allocation3], 0
    // Predicated region
    $region2: #{_qae_forward_impl.1} parent=1 // pred_check
      _
    $region3: #{_qae_forward_impl.1} parent=1 // pred_check_branch
      %9 = sbr.rel (0) target = $region5
    $region4: #{_qae_forward_impl.1} parent=1 // pred_region
      _
    $region5: #{_qae_forward_impl.1} parent=1 // pred_fallthru
      _
    // Predicated region
    $region6: #{_qae_forward_impl.1} parent=1 // pred_check
      _
    $region7: #{_qae_forward_impl.1} parent=1 // pred_check_branch
      %11 = sbr.rel (0) target = $region9
    $region8: #{_qae_forward_impl.1} parent=1 // pred_region
      %s13 = ssub.s32 32, 32
      %14 = vsyncadd [#allocation3], %s13
      %s16 = sshll.u32 %s1, 4
      %s17 = int_to_ptr.vmem [resolvable:$true] %s16
      %19 = dma.vmem_to_smem %s17, 32, [#allocation2], [#allocation3]
    $region9: #{_qae_forward_impl.1} parent=1 // pred_fallthru
      _
    // Predicated region
    $region10: #{_qae_forward_impl.1} parent=1 // pred_check
      _
    $region11: #{_qae_forward_impl.1} parent=1 // pred_check_branch
      %21 = sbr.rel (0) target = $region13
    $region12: #{_qae_forward_impl.1} parent=1 // pred_region
      %22 = dma.done [#allocation3], 32
    $region13: #{_qae_forward_impl.1} parent=1 // pred_fallthru
      _
    %23 = sfence
    %s24 = sld [smem:[#allocation2]]
    %s25 = sld [smem:[#allocation2 + $0x1]]
    %s26 = sld [smem:[#allocation2 + $0x2]]
    %s27 = sld [smem:[#allocation2 + $0x3]]
    %s28 = sld [smem:[#allocation2 + $0x4]]
    %s29 = sld [smem:[#allocation2 + $0x5]]
    %s30 = sld [smem:[#allocation2 + $0x6]]
    %s31 = sld [smem:[#allocation2 + $0x7]]
    %s32 = sld [smem:[#allocation2 + $0x80]]
    %s33 = sld [smem:[#allocation2 + $0x81]]
    %s34 = sld [smem:[#allocation2 + $0x82]]
    %s35 = sld [smem:[#allocation2 + $0x83]]
    %s36 = sld [smem:[#allocation2 + $0x84]]
    %s37 = sld [smem:[#allocation2 + $0x85]]
    %s38 = sld [smem:[#allocation2 + $0x86]]
    %s39 = sld [smem:[#allocation2 + $0x87]]
    %v40 = vld [vmem:[%s0] sm:$0xff]
    %v41 = vld [vmem:[%s0 + $0x8] sm:$0xff]
    %v42 = vld [vmem:[%s0 + $0x10] sm:$0xff]
    %v43 = vld [vmem:[%s0 + $0x18] sm:$0xff]
    %v44 = vmul.f32 %v40, 0.5
    %v45 = vmul.f32 %v41, 0.5
    %v46 = vmul.f32 %v42, 0.5
    %v47 = vmul.f32 %v43, 0.5
    %v48 = vand.u32 2147483647, %v44
    %vm49 = vcmp.le.f32.partialorder %v48, 0.7853982
    %vm50 = vcmp.lt.s32.totalorder %v44, 0
    %v51 = vand.u32 %v44, 2139095040
    %v52 = vshrl.u32 %v51, 23
    %v53 = vsub.s32 %v52, 127
    %v54 = vand.u32 2147483647, %v44
    %v55 = vand.u32 %v54, 8388607
    %v56 = vor.u32 %v55, 8388608
    %v57 = vsub.s32 0, %v56
    %v58 = vadd.s32 %v53, 1
    %vm59 = vcmp.gt.s32.totalorder %v58, 0
    %v60 = vsel %vm59, %v58, 0
    %v61 = vshrl.u32 %v60, 5
    %v62 = vand.u32 %v60, 31
    %v63 = vsub.s32 32, %v62
    %v64 = vshrl.u32 683565275, %v63
    %v65 = vshll.u32 683565275, %v62
    %v66 = vshrl.u32 2475754826, %v63
    %v67 = vor.u32 %v65, %v66
    %v68 = vshll.u32 2475754826, %v62
    %v69 = vshrl.u32 2131351028, %v63
    %v70 = vor.u32 %v68, %v69
    %v71 = vshll.u32 2131351028, %v62
    %v72 = vshrl.u32 2102212464, %v63
    %v73 = vor.u32 %v71, %v72
    %v74 = vshll.u32 2102212464, %v62
    %v75 = vshrl.u32 920167782, %v63
    %v76 = vor.u32 %v74, %v75
    %v77 = vshll.u32 920167782, %v62
    %v78 = vshrl.u32 1326507024, %v63
    %v79 = vor.u32 %v77, %v78
    %vm80 = vcmp.lt.s32.totalorder %v61, 1
    %vm81 = vcmp.lt.s32.totalorder %v61, 2
    %vm82 = vcmp.lt.s32.totalorder %v61, 3
    %vm83 = vcmp.lt.s32.totalorder %v61, 4
    %v84 = vsel %vm80, %v64, %v67
    %v85 = vsel %vm83, %v73, 2102212464
    %v86 = vsel %vm82, %v70, %v85
    %v87 = vsel %vm81, %v84, %v86
    %v88 = vsel %vm80, %v67, %v70
    %v89 = vsel %vm83, %v76, 920167782
    %v90 = vsel %vm82, %v73, %v89
    %v91 = vsel %vm81, %v88, %v90
    %v92 = vsel %vm80, %v70, %v73
    %v93 = vsel %vm83, %v79, 1326507024
    %v94 = vsel %vm82, %v76, %v93
    %v95 = vsel %vm81, %v92, %v94
    %v96 = vshll.u32 %v56, 8
    %v97 = vmul.u32.u64.compose %v96, %v95
    %v98 = vextract.low.u32 %v97
    %v99 = vextract.high.u32 %v97
    %v100 = vmul.u32.u64.compose %v96, %v91
    %v101 = vextract.low.u32 %v100
    %v102 = vextract.high.u32 %v100
    %v103 = vmul.u32 %v96, %v87
    %v104 = vadd.s32 %v99, %v101
    %vm105 = vc.u32 %v99, %v101
    %v106 = vadd.s32 %v102, 1
    %v107 = vsel %vm105, %v106, %v102
    %v108 = vadd.s32 %v103, %v107
    %v109 = vadd.s32 %v108, 536870912
    %v110 = vshrl.u32 %v109, 30
    %v111 = vshll.u32 %v110, 30
    %v112 = vsub.s32 %v108, %v111
    %vm113 = vcmp.lt.s32.totalorder %v112, 0
    %v114 = vsub.s32 0, %v112
    %v115 = vsel %vm113, %v114, %v112
    %v116 = vclz %v115
    %v117 = vsub.s32 %v116, 2
    %vm118 = vcmp.gt.s32.totalorder 0, %v117
    %v119 = vsel %vm118, 0, %v117
    %v120 = vsub.s32 32, %v119
    %v121 = vshll.u32 %v112, %v119
    %v122 = vshrl.u32 %v104, %v120
    %v123 = vor.u32 %v121, %v122
    %v124 = vsub.s32 4294967266, %v119
    %v125 = vadd.s32 %v124, 127
    %v126 = vshll.u32 %v125, 23
    %v127 = vor.u32 4788187, %v126
    %v128 = vand.u32 2147483647, %v127
    %v130 = vcvt.s32.f32 %v123
    %v131 = vmul.f32 %v130, %v128
    %v132 = vxor.u32 %v131, 2147483648
    %v133 = vsel %vm50, %v132, %v131
    %v134 = vsub.s32 4, %v110
    %v135 = vsel %vm50, %v134, %v110
    %v136 = vsel %vm49, %v44, %v133
    %v137 = vsel %vm49, 0, %v135
    %v138 = vcosq.f32.pop %v136
    %v139 = vsinq.f32.pop %v136
    %vm140 = vweird.f32 %v44
    %v141 = vand.u32 %v137, 3
    %vm142 = vcmp.lt.s32.totalorder %v141, 2
    %vm143 = vcmp.eq.s32.totalorder %v141, 0
    %v144 = vxor.u32 %v139, 2147483648
    %v145 = vsel %vm143, %v138, %v144
    %vm146 = vcmp.eq.s32.totalorder %v141, 2
    %v147 = vxor.u32 %v138, 2147483648
    %v148 = vsel %vm146, %v147, %v139
    %v149 = vsel %vm142, %v145, %v148
    %v150 = vsel %vm140, nan, %v149
    %v151 = vand.u32 2147483647, %v45
    %vm152 = vcmp.le.f32.partialorder %v151, 0.7853982
    %vm153 = vcmp.lt.s32.totalorder %v45, 0
    %v154 = vand.u32 %v45, 2139095040
    %v155 = vshrl.u32 %v154, 23
    %v156 = vsub.s32 %v155, 127
    %v157 = vand.u32 2147483647, %v45
    %v158 = vand.u32 %v157, 8388607
    %v159 = vor.u32 %v158, 8388608
    %v160 = vsub.s32 0, %v159
    %v161 = vadd.s32 %v156, 1
    %vm162 = vcmp.gt.s32.totalorder %v161, 0
    %v163 = vsel %vm162, %v161, 0
    %v164 = vshrl.u32 %v163, 5
    %v165 = vand.u32 %v163, 31
    %v166 = vsub.s32 32, %v165
    %v167 = vshrl.u32 683565275, %v166
    %v168 = vshll.u32 683565275, %v165
    %v169 = vshrl.u32 2475754826, %v166
    %v170 = vor.u32 %v168, %v169
    %v171 = vshll.u32 2475754826, %v165
    %v172 = vshrl.u32 2131351028, %v166
    %v173 = vor.u32 %v171, %v172
    %v174 = vshll.u32 2131351028, %v165
    %v175 = vshrl.u32 2102212464, %v166
    %v176 = vor.u32 %v174, %v175
    %v177 = vshll.u32 2102212464, %v165
    %v178 = vshrl.u32 920167782, %v166
    %v179 = vor.u32 %v177, %v178
    %v180 = vshll.u32 920167782, %v165
    %v181 = vshrl.u32 1326507024, %v166
    %v182 = vor.u32 %v180, %v181
    %vm183 = vcmp.lt.s32.totalorder %v164, 1
    %vm184 = vcmp.lt.s32.totalorder %v164, 2
    %vm185 = vcmp.lt.s32.totalorder %v164, 3
    %vm186 = vcmp.lt.s32.totalorder %v164, 4
    %v187 = vsel %vm183, %v167, %v170
    %v188 = vsel %vm186, %v176, 2102212464
    %v189 = vsel %vm185, %v173, %v188
    %v190 = vsel %vm184, %v187, %v189
    %v191 = vsel %vm183, %v170, %v173
    %v192 = vsel %vm186, %v179, 920167782
    %v193 = vsel %vm185, %v176, %v192
    %v194 = vsel %vm184, %v191, %v193
    %v195 = vsel %vm183, %v173, %v176
    %v196 = vsel %vm186, %v182, 1326507024
    %v197 = vsel %vm185, %v179, %v196
    %v198 = vsel %vm184, %v195, %v197
    %v199 = vshll.u32 %v159, 8
    %v200 = vmul.u32.u64.compose %v199, %v198
    %v201 = vextract.low.u32 %v200
    %v202 = vextract.high.u32 %v200
    %v203 = vmul.u32.u64.compose %v199, %v194
    %v204 = vextract.low.u32 %v203
    %v205 = vextract.high.u32 %v203
    %v206 = vmul.u32 %v199, %v190
    %v207 = vadd.s32 %v202, %v204
    %vm208 = vc.u32 %v202, %v204
    %v209 = vadd.s32 %v205, 1
    %v210 = vsel %vm208, %v209, %v205
    %v211 = vadd.s32 %v206, %v210
    %v212 = vadd.s32 %v211, 536870912
    %v213 = vshrl.u32 %v212, 30
    %v214 = vshll.u32 %v213, 30
    %v215 = vsub.s32 %v211, %v214
    %vm216 = vcmp.lt.s32.totalorder %v215, 0
    %v217 = vsub.s32 0, %v215
    %v218 = vsel %vm216, %v217, %v215
    %v219 = vclz %v218
    %v220 = vsub.s32 %v219, 2
    %vm221 = vcmp.gt.s32.totalorder 0, %v220
    %v222 = vsel %vm221, 0, %v220
    %v223 = vsub.s32 32, %v222
    %v224 = vshll.u32 %v215, %v222
    %v225 = vshrl.u32 %v207, %v223
    %v226 = vor.u32 %v224, %v225
    %v227 = vsub.s32 4294967266, %v222
    %v228 = vadd.s32 %v227, 127
    %v229 = vshll.u32 %v228, 23
    %v230 = vor.u32 4788187, %v229
    %v231 = vand.u32 2147483647, %v230
    %v233 = vcvt.s32.f32 %v226
    %v234 = vmul.f32 %v233, %v231
    %v235 = vxor.u32 %v234, 2147483648
    %v236 = vsel %vm153, %v235, %v234
    %v237 = vsub.s32 4, %v213
    %v238 = vsel %vm153, %v237, %v213
    %v239 = vsel %vm152, %v45, %v236
    %v240 = vsel %vm152, 0, %v238
    %v241 = vcosq.f32.pop %v239
    %v242 = vsinq.f32.pop %v239
    %vm243 = vweird.f32 %v45
    %v244 = vand.u32 %v240, 3
    %vm245 = vcmp.lt.s32.totalorder %v244, 2
    %vm246 = vcmp.eq.s32.totalorder %v244, 0
    %v247 = vxor.u32 %v242, 2147483648
    %v248 = vsel %vm246, %v241, %v247
    %vm249 = vcmp.eq.s32.totalorder %v244, 2
    %v250 = vxor.u32 %v241, 2147483648
    %v251 = vsel %vm249, %v250, %v242
    %v252 = vsel %vm245, %v248, %v251
    %v253 = vsel %vm243, nan, %v252
    %v254 = vand.u32 2147483647, %v46
    %vm255 = vcmp.le.f32.partialorder %v254, 0.7853982
    %vm256 = vcmp.lt.s32.totalorder %v46, 0
    %v257 = vand.u32 %v46, 2139095040
    %v258 = vshrl.u32 %v257, 23
    %v259 = vsub.s32 %v258, 127
    %v260 = vand.u32 2147483647, %v46
    %v261 = vand.u32 %v260, 8388607
    %v262 = vor.u32 %v261, 8388608
    %v263 = vsub.s32 0, %v262
    %v264 = vadd.s32 %v259, 1
    %vm265 = vcmp.gt.s32.totalorder %v264, 0
    %v266 = vsel %vm265, %v264, 0
    %v267 = vshrl.u32 %v266, 5
    %v268 = vand.u32 %v266, 31
    %v269 = vsub.s32 32, %v268
    %v270 = vshrl.u32 683565275, %v269
    %v271 = vshll.u32 683565275, %v268
    %v272 = vshrl.u32 2475754826, %v269
    %v273 = vor.u32 %v271, %v272
    %v274 = vshll.u32 2475754826, %v268
    %v275 = vshrl.u32 2131351028, %v269
    %v276 = vor.u32 %v274, %v275
    %v277 = vshll.u32 2131351028, %v268
    %v278 = vshrl.u32 2102212464, %v269
    %v279 = vor.u32 %v277, %v278
    %v280 = vshll.u32 2102212464, %v268
    %v281 = vshrl.u32 920167782, %v269
    %v282 = vor.u32 %v280, %v281
    %v283 = vshll.u32 920167782, %v268
    %v284 = vshrl.u32 1326507024, %v269
    %v285 = vor.u32 %v283, %v284
    %vm286 = vcmp.lt.s32.totalorder %v267, 1
    %vm287 = vcmp.lt.s32.totalorder %v267, 2
    %vm288 = vcmp.lt.s32.totalorder %v267, 3
    %vm289 = vcmp.lt.s32.totalorder %v267, 4
    %v290 = vsel %vm286, %v270, %v273
    %v291 = vsel %vm289, %v279, 2102212464
    %v292 = vsel %vm288, %v276, %v291
    %v293 = vsel %vm287, %v290, %v292
    %v294 = vsel %vm286, %v273, %v276
    %v295 = vsel %vm289, %v282, 920167782
    %v296 = vsel %vm288, %v279, %v295
    %v297 = vsel %vm287, %v294, %v296
    %v298 = vsel %vm286, %v276, %v279
    %v299 = vsel %vm289, %v285, 1326507024
    %v300 = vsel %vm288, %v282, %v299
    %v301 = vsel %vm287, %v298, %v300
    %v302 = vshll.u32 %v262, 8
    %v303 = vmul.u32.u64.compose %v302, %v301
    %v304 = vextract.low.u32 %v303
    %v305 = vextract.high.u32 %v303
    %v306 = vmul.u32.u64.compose %v302, %v297
    %v307 = vextract.low.u32 %v306
    %v308 = vextract.high.u32 %v306
    %v309 = vmul.u32 %v302, %v293
    %v310 = vadd.s32 %v305, %v307
    %vm311 = vc.u32 %v305, %v307
    %v312 = vadd.s32 %v308, 1
    %v313 = vsel %vm311, %v312, %v308
    %v314 = vadd.s32 %v309, %v313
    %v315 = vadd.s32 %v314, 536870912
    %v316 = vshrl.u32 %v315, 30
    %v317 = vshll.u32 %v316, 30
    %v318 = vsub.s32 %v314, %v317
    %vm319 = vcmp.lt.s32.totalorder %v318, 0
    %v320 = vsub.s32 0, %v318
    %v321 = vsel %vm319, %v320, %v318
    %v322 = vclz %v321
    %v323 = vsub.s32 %v322, 2
    %vm324 = vcmp.gt.s32.totalorder 0, %v323
    %v325 = vsel %vm324, 0, %v323
    %v326 = vsub.s32 32, %v325
    %v327 = vshll.u32 %v318, %v325
    %v328 = vshrl.u32 %v310, %v326
    %v329 = vor.u32 %v327, %v328
    %v330 = vsub.s32 4294967266, %v325
    %v331 = vadd.s32 %v330, 127
    %v332 = vshll.u32 %v331, 23
    %v333 = vor.u32 4788187, %v332
    %v334 = vand.u32 2147483647, %v333
    %v336 = vcvt.s32.f32 %v329
    %v337 = vmul.f32 %v336, %v334
    %v338 = vxor.u32 %v337, 2147483648
    %v339 = vsel %vm256, %v338, %v337
    %v340 = vsub.s32 4, %v316
    %v341 = vsel %vm256, %v340, %v316
    %v342 = vsel %vm255, %v46, %v339
    %v343 = vsel %vm255, 0, %v341
    %v344 = vcosq.f32.pop %v342
    %v345 = vsinq.f32.pop %v342
    %vm346 = vweird.f32 %v46
    %v347 = vand.u32 %v343, 3
    %vm348 = vcmp.lt.s32.totalorder %v347, 2
    %vm349 = vcmp.eq.s32.totalorder %v347, 0
    %v350 = vxor.u32 %v345, 2147483648
    %v351 = vsel %vm349, %v344, %v350
    %vm352 = vcmp.eq.s32.totalorder %v347, 2
    %v353 = vxor.u32 %v344, 2147483648
    %v354 = vsel %vm352, %v353, %v345
    %v355 = vsel %vm348, %v351, %v354
    %v356 = vsel %vm346, nan, %v355
    %v357 = vand.u32 2147483647, %v47
    %vm358 = vcmp.le.f32.partialorder %v357, 0.7853982
    %vm359 = vcmp.lt.s32.totalorder %v47, 0
    %v360 = vand.u32 %v47, 2139095040
    %v361 = vshrl.u32 %v360, 23
    %v362 = vsub.s32 %v361, 127
    %v363 = vand.u32 2147483647, %v47
    %v364 = vand.u32 %v363, 8388607
    %v365 = vor.u32 %v364, 8388608
    %v366 = vsub.s32 0, %v365
    %v367 = vadd.s32 %v362, 1
    %vm368 = vcmp.gt.s32.totalorder %v367, 0
    %v369 = vsel %vm368, %v367, 0
    %v370 = vshrl.u32 %v369, 5
    %v371 = vand.u32 %v369, 31
    %v372 = vsub.s32 32, %v371
    %v373 = vshrl.u32 683565275, %v372
    %v374 = vshll.u32 683565275, %v371
    %v375 = vshrl.u32 2475754826, %v372
    %v376 = vor.u32 %v374, %v375
    %v377 = vshll.u32 2475754826, %v371
    %v378 = vshrl.u32 2131351028, %v372
    %v379 = vor.u32 %v377, %v378
    %v380 = vshll.u32 2131351028, %v371
    %v381 = vshrl.u32 2102212464, %v372
    %v382 = vor.u32 %v380, %v381
    %v383 = vshll.u32 2102212464, %v371
    %v384 = vshrl.u32 920167782, %v372
    %v385 = vor.u32 %v383, %v384
    %v386 = vshll.u32 920167782, %v371
    %v387 = vshrl.u32 1326507024, %v372
    %v388 = vor.u32 %v386, %v387
    %vm389 = vcmp.lt.s32.totalorder %v370, 1
    %vm390 = vcmp.lt.s32.totalorder %v370, 2
    %vm391 = vcmp.lt.s32.totalorder %v370, 3
    %vm392 = vcmp.lt.s32.totalorder %v370, 4
    %v393 = vsel %vm389, %v373, %v376
    %v394 = vsel %vm392, %v382, 2102212464
    %v395 = vsel %vm391, %v379, %v394
    %v396 = vsel %vm390, %v393, %v395
    %v397 = vsel %vm389, %v376, %v379
    %v398 = vsel %vm392, %v385, 920167782
    %v399 = vsel %vm391, %v382, %v398
    %v400 = vsel %vm390, %v397, %v399
    %v401 = vsel %vm389, %v379, %v382
    %v402 = vsel %vm392, %v388, 1326507024
    %v403 = vsel %vm391, %v385, %v402
    %v404 = vsel %vm390, %v401, %v403
    %v405 = vshll.u32 %v365, 8
    %v406 = vmul.u32.u64.compose %v405, %v404
    %v407 = vextract.low.u32 %v406
    %v408 = vextract.high.u32 %v406
    %v409 = vmul.u32.u64.compose %v405, %v400
    %v410 = vextract.low.u32 %v409
    %v411 = vextract.high.u32 %v409
    %v412 = vmul.u32 %v405, %v396
    %v413 = vadd.s32 %v408, %v410
    %vm414 = vc.u32 %v408, %v410
    %v415 = vadd.s32 %v411, 1
    %v416 = vsel %vm414, %v415, %v411
    %v417 = vadd.s32 %v412, %v416
    %v418 = vadd.s32 %v417, 536870912
    %v419 = vshrl.u32 %v418, 30
    %v420 = vshll.u32 %v419, 30
    %v421 = vsub.s32 %v417, %v420
    %vm422 = vcmp.lt.s32.totalorder %v421, 0
    %v423 = vsub.s32 0, %v421
    %v424 = vsel %vm422, %v423, %v421
    %v425 = vclz %v424
    %v426 = vsub.s32 %v425, 2
    %vm427 = vcmp.gt.s32.totalorder 0, %v426
    %v428 = vsel %vm427, 0, %v426
    %v429 = vsub.s32 32, %v428
    %v430 = vshll.u32 %v421, %v428
    %v431 = vshrl.u32 %v413, %v429
    %v432 = vor.u32 %v430, %v431
    %v433 = vsub.s32 4294967266, %v428
    %v434 = vadd.s32 %v433, 127
    %v435 = vshll.u32 %v434, 23
    %v436 = vor.u32 4788187, %v435
    %v437 = vand.u32 2147483647, %v436
    %v439 = vcvt.s32.f32 %v432
    %v440 = vmul.f32 %v439, %v437
    %v441 = vxor.u32 %v440, 2147483648
    %v442 = vsel %vm359, %v441, %v440
    %v443 = vsub.s32 4, %v419
    %v444 = vsel %vm359, %v443, %v419
    %v445 = vsel %vm358, %v47, %v442
    %v446 = vsel %vm358, 0, %v444
    %v447 = vcosq.f32.pop %v445
    %v448 = vsinq.f32.pop %v445
    %vm449 = vweird.f32 %v47
    %v450 = vand.u32 %v446, 3
    %vm451 = vcmp.lt.s32.totalorder %v450, 2
    %vm452 = vcmp.eq.s32.totalorder %v450, 0
    %v453 = vxor.u32 %v448, 2147483648
    %v454 = vsel %vm452, %v447, %v453
    %vm455 = vcmp.eq.s32.totalorder %v450, 2
    %v456 = vxor.u32 %v447, 2147483648
    %v457 = vsel %vm455, %v456, %v448
    %v458 = vsel %vm451, %v454, %v457
    %v459 = vsel %vm449, nan, %v458
    %v460 = vand.u32 2147483647, %v44
    %vm461 = vcmp.le.f32.partialorder %v460, 0.7853982
    %vm462 = vcmp.lt.s32.totalorder %v44, 0
    %v463 = vand.u32 %v44, 2139095040
    %v464 = vshrl.u32 %v463, 23
    %v465 = vsub.s32 %v464, 127
    %v466 = vand.u32 2147483647, %v44
    %v467 = vand.u32 %v466, 8388607
    %v468 = vor.u32 %v467, 8388608
    %v469 = vsub.s32 0, %v468
    %v470 = vadd.s32 %v465, 1
    %vm471 = vcmp.gt.s32.totalorder %v470, 0
    %v472 = vsel %vm471, %v470, 0
    %v473 = vshrl.u32 %v472, 5
    %v474 = vand.u32 %v472, 31
    %v475 = vsub.s32 32, %v474
    %v476 = vshrl.u32 683565275, %v475
    %v477 = vshll.u32 683565275, %v474
    %v478 = vshrl.u32 2475754826, %v475
    %v479 = vor.u32 %v477, %v478
    %v480 = vshll.u32 2475754826, %v474
    %v481 = vshrl.u32 2131351028, %v475
    %v482 = vor.u32 %v480, %v481
    %v483 = vshll.u32 2131351028, %v474
    %v484 = vshrl.u32 2102212464, %v475
    %v485 = vor.u32 %v483, %v484
    %v486 = vshll.u32 2102212464, %v474
    %v487 = vshrl.u32 920167782, %v475
    %v488 = vor.u32 %v486, %v487
    %v489 = vshll.u32 920167782, %v474
    %v490 = vshrl.u32 1326507024, %v475
    %v491 = vor.u32 %v489, %v490
    %vm492 = vcmp.lt.s32.totalorder %v473, 1
    %vm493 = vcmp.lt.s32.totalorder %v473, 2
    %vm494 = vcmp.lt.s32.totalorder %v473, 3
    %vm495 = vcmp.lt.s32.totalorder %v473, 4
    %v496 = vsel %vm492, %v476, %v479
    %v497 = vsel %vm495, %v485, 2102212464
    %v498 = vsel %vm494, %v482, %v497
    %v499 = vsel %vm493, %v496, %v498
    %v500 = vsel %vm492, %v479, %v482
    %v501 = vsel %vm495, %v488, 920167782
    %v502 = vsel %vm494, %v485, %v501
    %v503 = vsel %vm493, %v500, %v502
    %v504 = vsel %vm492, %v482, %v485
    %v505 = vsel %vm495, %v491, 1326507024
    %v506 = vsel %vm494, %v488, %v505
    %v507 = vsel %vm493, %v504, %v506
    %v508 = vshll.u32 %v468, 8
    %v509 = vmul.u32.u64.compose %v508, %v507
    %v510 = vextract.low.u32 %v509
    %v511 = vextract.high.u32 %v509
    %v512 = vmul.u32.u64.compose %v508, %v503
    %v513 = vextract.low.u32 %v512
    %v514 = vextract.high.u32 %v512
    %v515 = vmul.u32 %v508, %v499
    %v516 = vadd.s32 %v511, %v513
    %vm517 = vc.u32 %v511, %v513
    %v518 = vadd.s32 %v514, 1
    %v519 = vsel %vm517, %v518, %v514
    %v520 = vadd.s32 %v515, %v519
    %v521 = vadd.s32 %v520, 536870912
    %v522 = vshrl.u32 %v521, 30
    %v523 = vshll.u32 %v522, 30
    %v524 = vsub.s32 %v520, %v523
    %vm525 = vcmp.lt.s32.totalorder %v524, 0
    %v526 = vsub.s32 0, %v524
    %v527 = vsel %vm525, %v526, %v524
    %v528 = vclz %v527
    %v529 = vsub.s32 %v528, 2
    %vm530 = vcmp.gt.s32.totalorder 0, %v529
    %v531 = vsel %vm530, 0, %v529
    %v532 = vsub.s32 32, %v531
    %v533 = vshll.u32 %v524, %v531
    %v534 = vshrl.u32 %v516, %v532
    %v535 = vor.u32 %v533, %v534
    %v536 = vsub.s32 4294967266, %v531
    %v537 = vadd.s32 %v536, 127
    %v538 = vshll.u32 %v537, 23
    %v539 = vor.u32 4788187, %v538
    %v540 = vand.u32 2147483647, %v539
    %v542 = vcvt.s32.f32 %v535
    %v543 = vmul.f32 %v542, %v540
    %v544 = vxor.u32 %v543, 2147483648
    %v545 = vsel %vm462, %v544, %v543
    %v546 = vsub.s32 4, %v522
    %v547 = vsel %vm462, %v546, %v522
    %v548 = vsel %vm461, %v44, %v545
    %v549 = vsel %vm461, 0, %v547
    %v550 = vcosq.f32.pop %v548
    %v551 = vsinq.f32.pop %v548
    %vm552 = vweird.f32 %v44
    %v553 = vadd.s32 %v549, 3
    %v554 = vand.u32 %v553, 3
    %vm555 = vcmp.lt.s32.totalorder %v554, 2
    %vm556 = vcmp.eq.s32.totalorder %v554, 0
    %v557 = vxor.u32 %v551, 2147483648
    %v558 = vsel %vm556, %v550, %v557
    %vm559 = vcmp.eq.s32.totalorder %v554, 2
    %v560 = vxor.u32 %v550, 2147483648
    %v561 = vsel %vm559, %v560, %v551
    %v562 = vsel %vm555, %v558, %v561
    %v563 = vsel %vm552, nan, %v562
    %v564 = vand.u32 2147483647, %v45
    %vm565 = vcmp.le.f32.partialorder %v564, 0.7853982
    %vm566 = vcmp.lt.s32.totalorder %v45, 0
    %v567 = vand.u32 %v45, 2139095040
    %v568 = vshrl.u32 %v567, 23
    %v569 = vsub.s32 %v568, 127
    %v570 = vand.u32 2147483647, %v45
    %v571 = vand.u32 %v570, 8388607
    %v572 = vor.u32 %v571, 8388608
    %v573 = vsub.s32 0, %v572
    %v574 = vadd.s32 %v569, 1
    %vm575 = vcmp.gt.s32.totalorder %v574, 0
    %v576 = vsel %vm575, %v574, 0
    %v577 = vshrl.u32 %v576, 5
    %v578 = vand.u32 %v576, 31
    %v579 = vsub.s32 32, %v578
    %v580 = vshrl.u32 683565275, %v579
    %v581 = vshll.u32 683565275, %v578
    %v582 = vshrl.u32 2475754826, %v579
    %v583 = vor.u32 %v581, %v582
    %v584 = vshll.u32 2475754826, %v578
    %v585 = vshrl.u32 2131351028, %v579
    %v586 = vor.u32 %v584, %v585
    %v587 = vshll.u32 2131351028, %v578
    %v588 = vshrl.u32 2102212464, %v579
    %v589 = vor.u32 %v587, %v588
    %v590 = vshll.u32 2102212464, %v578
    %v591 = vshrl.u32 920167782, %v579
    %v592 = vor.u32 %v590, %v591
    %v593 = vshll.u32 920167782, %v578
    %v594 = vshrl.u32 1326507024, %v579
    %v595 = vor.u32 %v593, %v594
    %vm596 = vcmp.lt.s32.totalorder %v577, 1
    %vm597 = vcmp.lt.s32.totalorder %v577, 2
    %vm598 = vcmp.lt.s32.totalorder %v577, 3
    %vm599 = vcmp.lt.s32.totalorder %v577, 4
    %v600 = vsel %vm596, %v580, %v583
    %v601 = vsel %vm599, %v589, 2102212464
    %v602 = vsel %vm598, %v586, %v601
    %v603 = vsel %vm597, %v600, %v602
    %v604 = vsel %vm596, %v583, %v586
    %v605 = vsel %vm599, %v592, 920167782
    %v606 = vsel %vm598, %v589, %v605
    %v607 = vsel %vm597, %v604, %v606
    %v608 = vsel %vm596, %v586, %v589
    %v609 = vsel %vm599, %v595, 1326507024
    %v610 = vsel %vm598, %v592, %v609
    %v611 = vsel %vm597, %v608, %v610
    %v612 = vshll.u32 %v572, 8
    %v613 = vmul.u32.u64.compose %v612, %v611
    %v614 = vextract.low.u32 %v613
    %v615 = vextract.high.u32 %v613
    %v616 = vmul.u32.u64.compose %v612, %v607
    %v617 = vextract.low.u32 %v616
    %v618 = vextract.high.u32 %v616
    %v619 = vmul.u32 %v612, %v603
    %v620 = vadd.s32 %v615, %v617
    %vm621 = vc.u32 %v615, %v617
    %v622 = vadd.s32 %v618, 1
    %v623 = vsel %vm621, %v622, %v618
    %v624 = vadd.s32 %v619, %v623
    %v625 = vadd.s32 %v624, 536870912
    %v626 = vshrl.u32 %v625, 30
    %v627 = vshll.u32 %v626, 30
    %v628 = vsub.s32 %v624, %v627
    %vm629 = vcmp.lt.s32.totalorder %v628, 0
    %v630 = vsub.s32 0, %v628
    %v631 = vsel %vm629, %v630, %v628
    %v632 = vclz %v631
    %v633 = vsub.s32 %v632, 2
    %vm634 = vcmp.gt.s32.totalorder 0, %v633
    %v635 = vsel %vm634, 0, %v633
    %v636 = vsub.s32 32, %v635
    %v637 = vshll.u32 %v628, %v635
    %v638 = vshrl.u32 %v620, %v636
    %v639 = vor.u32 %v637, %v638
    %v640 = vsub.s32 4294967266, %v635
    %v641 = vadd.s32 %v640, 127
    %v642 = vshll.u32 %v641, 23
    %v643 = vor.u32 4788187, %v642
    %v644 = vand.u32 2147483647, %v643
    %v646 = vcvt.s32.f32 %v639
    %v647 = vmul.f32 %v646, %v644
    %v648 = vxor.u32 %v647, 2147483648
    %v649 = vsel %vm566, %v648, %v647
    %v650 = vsub.s32 4, %v626
    %v651 = vsel %vm566, %v650, %v626
    %v652 = vsel %vm565, %v45, %v649
    %v653 = vsel %vm565, 0, %v651
    %v654 = vcosq.f32.pop %v652
    %v655 = vsinq.f32.pop %v652
    %vm656 = vweird.f32 %v45
    %v657 = vadd.s32 %v653, 3
    %v658 = vand.u32 %v657, 3
    %vm659 = vcmp.lt.s32.totalorder %v658, 2
    %vm660 = vcmp.eq.s32.totalorder %v658, 0
    %v661 = vxor.u32 %v655, 2147483648
    %v662 = vsel %vm660, %v654, %v661
    %vm663 = vcmp.eq.s32.totalorder %v658, 2
    %v664 = vxor.u32 %v654, 2147483648
    %v665 = vsel %vm663, %v664, %v655
    %v666 = vsel %vm659, %v662, %v665
    %v667 = vsel %vm656, nan, %v666
    %v668 = vand.u32 2147483647, %v46
    %vm669 = vcmp.le.f32.partialorder %v668, 0.7853982
    %vm670 = vcmp.lt.s32.totalorder %v46, 0
    %v671 = vand.u32 %v46, 2139095040
    %v672 = vshrl.u32 %v671, 23
    %v673 = vsub.s32 %v672, 127
    %v674 = vand.u32 2147483647, %v46
    %v675 = vand.u32 %v674, 8388607
    %v676 = vor.u32 %v675, 8388608
    %v677 = vsub.s32 0, %v676
    %v678 = vadd.s32 %v673, 1
    %vm679 = vcmp.gt.s32.totalorder %v678, 0
    %v680 = vsel %vm679, %v678, 0
    %v681 = vshrl.u32 %v680, 5
    %v682 = vand.u32 %v680, 31
    %v683 = vsub.s32 32, %v682
    %v684 = vshrl.u32 683565275, %v683
    %v685 = vshll.u32 683565275, %v682
    %v686 = vshrl.u32 2475754826, %v683
    %v687 = vor.u32 %v685, %v686
    %v688 = vshll.u32 2475754826, %v682
    %v689 = vshrl.u32 2131351028, %v683
    %v690 = vor.u32 %v688, %v689
    %v691 = vshll.u32 2131351028, %v682
    %v692 = vshrl.u32 2102212464, %v683
    %v693 = vor.u32 %v691, %v692
    %v694 = vshll.u32 2102212464, %v682
    %v695 = vshrl.u32 920167782, %v683
    %v696 = vor.u32 %v694, %v695
    %v697 = vshll.u32 920167782, %v682
    %v698 = vshrl.u32 1326507024, %v683
    %v699 = vor.u32 %v697, %v698
    %vm700 = vcmp.lt.s32.totalorder %v681, 1
    %vm701 = vcmp.lt.s32.totalorder %v681, 2
    %vm702 = vcmp.lt.s32.totalorder %v681, 3
    %vm703 = vcmp.lt.s32.totalorder %v681, 4
    %v704 = vsel %vm700, %v684, %v687
    %v705 = vsel %vm703, %v693, 2102212464
    %v706 = vsel %vm702, %v690, %v705
    %v707 = vsel %vm701, %v704, %v706
    %v708 = vsel %vm700, %v687, %v690
    %v709 = vsel %vm703, %v696, 920167782
    %v710 = vsel %vm702, %v693, %v709
    %v711 = vsel %vm701, %v708, %v710
    %v712 = vsel %vm700, %v690, %v693
    %v713 = vsel %vm703, %v699, 1326507024
    %v714 = vsel %vm702, %v696, %v713
    %v715 = vsel %vm701, %v712, %v714
    %v716 = vshll.u32 %v676, 8
    %v717 = vmul.u32.u64.compose %v716, %v715
    %v718 = vextract.low.u32 %v717
    %v719 = vextract.high.u32 %v717
    %v720 = vmul.u32.u64.compose %v716, %v711
    %v721 = vextract.low.u32 %v720
    %v722 = vextract.high.u32 %v720
    %v723 = vmul.u32 %v716, %v707
    %v724 = vadd.s32 %v719, %v721
    %vm725 = vc.u32 %v719, %v721
    %v726 = vadd.s32 %v722, 1
    %v727 = vsel %vm725, %v726, %v722
    %v728 = vadd.s32 %v723, %v727
    %v729 = vadd.s32 %v728, 536870912
    %v730 = vshrl.u32 %v729, 30
    %v731 = vshll.u32 %v730, 30
    %v732 = vsub.s32 %v728, %v731
    %vm733 = vcmp.lt.s32.totalorder %v732, 0
    %v734 = vsub.s32 0, %v732
    %v735 = vsel %vm733, %v734, %v732
    %v736 = vclz %v735
    %v737 = vsub.s32 %v736, 2
    %vm738 = vcmp.gt.s32.totalorder 0, %v737
    %v739 = vsel %vm738, 0, %v737
    %v740 = vsub.s32 32, %v739
    %v741 = vshll.u32 %v732, %v739
    %v742 = vshrl.u32 %v724, %v740
    %v743 = vor.u32 %v741, %v742
    %v744 = vsub.s32 4294967266, %v739
    %v745 = vadd.s32 %v744, 127
    %v746 = vshll.u32 %v745, 23
    %v747 = vor.u32 4788187, %v746
    %v748 = vand.u32 2147483647, %v747
    %v750 = vcvt.s32.f32 %v743
    %v751 = vmul.f32 %v750, %v748
    %v752 = vxor.u32 %v751, 2147483648
    %v753 = vsel %vm670, %v752, %v751
    %v754 = vsub.s32 4, %v730
    %v755 = vsel %vm670, %v754, %v730
    %v756 = vsel %vm669, %v46, %v753
    %v757 = vsel %vm669, 0, %v755
    %v758 = vcosq.f32.pop %v756
    %v759 = vsinq.f32.pop %v756
    %vm760 = vweird.f32 %v46
    %v761 = vadd.s32 %v757, 3
    %v762 = vand.u32 %v761, 3
    %vm763 = vcmp.lt.s32.totalorder %v762, 2
    %vm764 = vcmp.eq.s32.totalorder %v762, 0
    %v765 = vxor.u32 %v759, 2147483648
    %v766 = vsel %vm764, %v758, %v765
    %vm767 = vcmp.eq.s32.totalorder %v762, 2
    %v768 = vxor.u32 %v758, 2147483648
    %v769 = vsel %vm767, %v768, %v759
    %v770 = vsel %vm763, %v766, %v769
    %v771 = vsel %vm760, nan, %v770
    %v772 = vand.u32 2147483647, %v47
    %vm773 = vcmp.le.f32.partialorder %v772, 0.7853982
    %vm774 = vcmp.lt.s32.totalorder %v47, 0
    %v775 = vand.u32 %v47, 2139095040
    %v776 = vshrl.u32 %v775, 23
    %v777 = vsub.s32 %v776, 127
    %v778 = vand.u32 2147483647, %v47
    %v779 = vand.u32 %v778, 8388607
    %v780 = vor.u32 %v779, 8388608
    %v781 = vsub.s32 0, %v780
    %v782 = vadd.s32 %v777, 1
    %vm783 = vcmp.gt.s32.totalorder %v782, 0
    %v784 = vsel %vm783, %v782, 0
    %v785 = vshrl.u32 %v784, 5
    %v786 = vand.u32 %v784, 31
    %v787 = vsub.s32 32, %v786
    %v788 = vshrl.u32 683565275, %v787
    %v789 = vshll.u32 683565275, %v786
    %v790 = vshrl.u32 2475754826, %v787
    %v791 = vor.u32 %v789, %v790
    %v792 = vshll.u32 2475754826, %v786
    %v793 = vshrl.u32 2131351028, %v787
    %v794 = vor.u32 %v792, %v793
    %v795 = vshll.u32 2131351028, %v786
    %v796 = vshrl.u32 2102212464, %v787
    %v797 = vor.u32 %v795, %v796
    %v798 = vshll.u32 2102212464, %v786
    %v799 = vshrl.u32 920167782, %v787
    %v800 = vor.u32 %v798, %v799
    %v801 = vshll.u32 920167782, %v786
    %v802 = vshrl.u32 1326507024, %v787
    %v803 = vor.u32 %v801, %v802
    %vm804 = vcmp.lt.s32.totalorder %v785, 1
    %vm805 = vcmp.lt.s32.totalorder %v785, 2
    %vm806 = vcmp.lt.s32.totalorder %v785, 3
    %vm807 = vcmp.lt.s32.totalorder %v785, 4
    %v808 = vsel %vm804, %v788, %v791
    %v809 = vsel %vm807, %v797, 2102212464
    %v810 = vsel %vm806, %v794, %v809
    %v811 = vsel %vm805, %v808, %v810
    %v812 = vsel %vm804, %v791, %v794
    %v813 = vsel %vm807, %v800, 920167782
    %v814 = vsel %vm806, %v797, %v813
    %v815 = vsel %vm805, %v812, %v814
    %v816 = vsel %vm804, %v794, %v797
    %v817 = vsel %vm807, %v803, 1326507024
    %v818 = vsel %vm806, %v800, %v817
    %v819 = vsel %vm805, %v816, %v818
    %v820 = vshll.u32 %v780, 8
    %v821 = vmul.u32.u64.compose %v820, %v819
    %v822 = vextract.low.u32 %v821
    %v823 = vextract.high.u32 %v821
    %v824 = vmul.u32.u64.compose %v820, %v815
    %v825 = vextract.low.u32 %v824
    %v826 = vextract.high.u32 %v824
    %v827 = vmul.u32 %v820, %v811
    %v828 = vadd.s32 %v823, %v825
    %vm829 = vc.u32 %v823, %v825
    %v830 = vadd.s32 %v826, 1
    %v831 = vsel %vm829, %v830, %v826
    %v832 = vadd.s32 %v827, %v831
    %v833 = vadd.s32 %v832, 536870912
    %v834 = vshrl.u32 %v833, 30
    %v835 = vshll.u32 %v834, 30
    %v836 = vsub.s32 %v832, %v835
    %vm837 = vcmp.lt.s32.totalorder %v836, 0
    %v838 = vsub.s32 0, %v836
    %v839 = vsel %vm837, %v838, %v836
    %v840 = vclz %v839
    %v841 = vsub.s32 %v840, 2
    %vm842 = vcmp.gt.s32.totalorder 0, %v841
    %v843 = vsel %vm842, 0, %v841
    %v844 = vsub.s32 32, %v843
    %v845 = vshll.u32 %v836, %v843
    %v846 = vshrl.u32 %v828, %v844
    %v847 = vor.u32 %v845, %v846
    %v848 = vsub.s32 4294967266, %v843
    %v849 = vadd.s32 %v848, 127
    %v850 = vshll.u32 %v849, 23
    %v851 = vor.u32 4788187, %v850
    %v852 = vand.u32 2147483647, %v851
    %v854 = vcvt.s32.f32 %v847
    %v855 = vmul.f32 %v854, %v852
    %v856 = vxor.u32 %v855, 2147483648
    %v857 = vsel %vm774, %v856, %v855
    %v858 = vsub.s32 4, %v834
    %v859 = vsel %vm774, %v858, %v834
    %v860 = vsel %vm773, %v47, %v857
    %v861 = vsel %vm773, 0, %v859
    %v862 = vcosq.f32.pop %v860
    %v863 = vsinq.f32.pop %v860
    %vm864 = vweird.f32 %v47
    %v865 = vadd.s32 %v861, 3
    %v866 = vand.u32 %v865, 3
    %vm867 = vcmp.lt.s32.totalorder %v866, 2
    %vm868 = vcmp.eq.s32.totalorder %v866, 0
    %v869 = vxor.u32 %v863, 2147483648
    %v870 = vsel %vm868, %v862, %v869
    %vm871 = vcmp.eq.s32.totalorder %v866, 2
    %v872 = vxor.u32 %v862, 2147483648
    %v873 = vsel %vm871, %v872, %v863
    %v874 = vsel %vm867, %v870, %v873
    %v875 = vsel %vm864, nan, %v874
    %v876 = vmul.f32 %v150, %v253
    %v877 = vmul.f32 %v150, %v667
    %v878 = vmul.f32 %v563, %v253
    %v879 = vmul.f32 %v563, %v667
    %v880 = vmul.f32 %v356, %v459
    %v881 = vmul.f32 %v356, %v875
    %v882 = vmul.f32 %v771, %v459
    %v883 = vmul.f32 %v771, %v875
    %v884 = vmul.f32 %v876, %v880
    %v885 = vmul.f32 %v878, %v880
    %v886 = vmul.f32 %v877, %v880
    %v887 = vmul.f32 %v879, %v880
    %v888 = vmul.f32 %v876, %v882
    %v889 = vmul.f32 %v878, %v882
    %v890 = vmul.f32 %v877, %v882
    %v891 = vmul.f32 %v879, %v882
    %v892 = vmul.f32 %v876, %v881
    %v893 = vmul.f32 %v878, %v881
    %v894 = vmul.f32 %v877, %v881
    %v895 = vmul.f32 %v879, %v881
    %v896 = vmul.f32 %v876, %v883
    %v897 = vmul.f32 %v878, %v883
    %v898 = vmul.f32 %v877, %v883
    %v899 = vmul.f32 %v879, %v883
    %v900 = vstv %s24
    %v901 = vstv %s32
    %v902 = vmul.f32 %v901, %v885
    %v903 = vmul.f32 %v901, %v884
    %v904 = vmul.f32 %v900, %v884
    %v905 = vsub.f32 %v904, %v902
    %v906 = vmul.f32 %v900, %v885
    %v907 = vadd.f32 %v906, %v903
    %v908 = vmul.f32 %v901, %v887
    %v909 = vmul.f32 %v901, %v886
    %v910 = vmul.f32 %v900, %v886
    %v911 = vsub.f32 %v910, %v908
    %v912 = vmul.f32 %v900, %v887
    %v913 = vadd.f32 %v912, %v909
    %v914 = vmul.f32 %v901, %v889
    %v915 = vmul.f32 %v901, %v888
    %v916 = vmul.f32 %v900, %v888
    %v917 = vsub.f32 %v916, %v914
    %v918 = vmul.f32 %v900, %v889
    %v919 = vadd.f32 %v918, %v915
    %v920 = vmul.f32 %v901, %v891
    %v921 = vmul.f32 %v901, %v890
    %v922 = vmul.f32 %v900, %v890
    %v923 = vsub.f32 %v922, %v920
    %v924 = vmul.f32 %v900, %v891
    %v925 = vadd.f32 %v924, %v921
    %v926 = vmul.f32 %v901, %v893
    %v927 = vmul.f32 %v901, %v892
    %v928 = vmul.f32 %v900, %v892
    %v929 = vsub.f32 %v928, %v926
    %v930 = vmul.f32 %v900, %v893
    %v931 = vadd.f32 %v930, %v927
    %v932 = vmul.f32 %v901, %v895
    %v933 = vmul.f32 %v901, %v894
    %v934 = vmul.f32 %v900, %v894
    %v935 = vsub.f32 %v934, %v932
    %v936 = vmul.f32 %v900, %v895
    %v937 = vadd.f32 %v936, %v933
    %v938 = vmul.f32 %v901, %v897
    %v939 = vmul.f32 %v901, %v896
    %v940 = vmul.f32 %v900, %v896
    %v941 = vsub.f32 %v940, %v938
    %v942 = vmul.f32 %v900, %v897
    %v943 = vadd.f32 %v942, %v939
    %v944 = vmul.f32 %v901, %v899
    %v945 = vmul.f32 %v901, %v898
    %v946 = vmul.f32 %v900, %v898
    %v947 = vsub.f32 %v946, %v944
    %v948 = vmul.f32 %v900, %v899
    %v949 = vadd.f32 %v948, %v945
    %v950 = vstv %s25
    %v951 = vstv %s33
    %v952 = vmul.f32 %v951, %v911
    %v953 = vmul.f32 %v951, %v905
    %v954 = vmul.f32 %v950, %v905
    %v955 = vsub.f32 %v954, %v952
    %v956 = vmul.f32 %v950, %v911
    %v957 = vadd.f32 %v956, %v953
    %v958 = vmul.f32 %v951, %v913
    %v959 = vmul.f32 %v951, %v907
    %v960 = vmul.f32 %v950, %v907
    %v961 = vsub.f32 %v960, %v958
    %v962 = vmul.f32 %v950, %v913
    %v963 = vadd.f32 %v962, %v959
    %v964 = vmul.f32 %v951, %v923
    %v965 = vmul.f32 %v951, %v917
    %v966 = vmul.f32 %v950, %v917
    %v967 = vsub.f32 %v966, %v964
    %v968 = vmul.f32 %v950, %v923
    %v969 = vadd.f32 %v968, %v965
    %v970 = vmul.f32 %v951, %v925
    %v971 = vmul.f32 %v951, %v919
    %v972 = vmul.f32 %v950, %v919
    %v973 = vsub.f32 %v972, %v970
    %v974 = vmul.f32 %v950, %v925
    %v975 = vadd.f32 %v974, %v971
    %v976 = vmul.f32 %v951, %v935
    %v977 = vmul.f32 %v951, %v929
    %v978 = vmul.f32 %v950, %v929
    %v979 = vsub.f32 %v978, %v976
    %v980 = vmul.f32 %v950, %v935
    %v981 = vadd.f32 %v980, %v977
    %v982 = vmul.f32 %v951, %v937
    %v983 = vmul.f32 %v951, %v931
    %v984 = vmul.f32 %v950, %v931
    %v985 = vsub.f32 %v984, %v982
    %v986 = vmul.f32 %v950, %v937
    %v987 = vadd.f32 %v986, %v983
    %v988 = vmul.f32 %v951, %v947
    %v989 = vmul.f32 %v951, %v941
    %v990 = vmul.f32 %v950, %v941
    %v991 = vsub.f32 %v990, %v988
    %v992 = vmul.f32 %v950, %v947
    %v993 = vadd.f32 %v992, %v989
    %v994 = vmul.f32 %v951, %v949
    %v995 = vmul.f32 %v951, %v943
    %v996 = vmul.f32 %v950, %v943
    %v997 = vsub.f32 %v996, %v994
    %v998 = vmul.f32 %v950, %v949
    %v999 = vadd.f32 %v998, %v995
    %v1000 = vstv %s26
    %v1001 = vstv %s34
    %v1002 = vmul.f32 %v1001, %v967
    %v1003 = vmul.f32 %v1001, %v955
    %v1004 = vmul.f32 %v1000, %v955
    %v1005 = vsub.f32 %v1004, %v1002
    %v1006 = vmul.f32 %v1000, %v967
    %v1007 = vadd.f32 %v1006, %v1003
    %v1008 = vmul.f32 %v1001, %v973
    %v1009 = vmul.f32 %v1001, %v961
    %v1010 = vmul.f32 %v1000, %v961
    %v1011 = vsub.f32 %v1010, %v1008
    %v1012 = vmul.f32 %v1000, %v973
    %v1013 = vadd.f32 %v1012, %v1009
    %v1014 = vmul.f32 %v1001, %v969
    %v1015 = vmul.f32 %v1001, %v957
    %v1016 = vmul.f32 %v1000, %v957
    %v1017 = vsub.f32 %v1016, %v1014
    %v1018 = vmul.f32 %v1000, %v969
    %v1019 = vadd.f32 %v1018, %v1015
    %v1020 = vmul.f32 %v1001, %v975
    %v1021 = vmul.f32 %v1001, %v963
    %v1022 = vmul.f32 %v1000, %v963
    %v1023 = vsub.f32 %v1022, %v1020
    %v1024 = vmul.f32 %v1000, %v975
    %v1025 = vadd.f32 %v1024, %v1021
    %v1026 = vmul.f32 %v1001, %v991
    %v1027 = vmul.f32 %v1001, %v979
    %v1028 = vmul.f32 %v1000, %v979
    %v1029 = vsub.f32 %v1028, %v1026
    %v1030 = vmul.f32 %v1000, %v991
    %v1031 = vadd.f32 %v1030, %v1027
    %v1032 = vmul.f32 %v1001, %v997
    %v1033 = vmul.f32 %v1001, %v985
    %v1034 = vmul.f32 %v1000, %v985
    %v1035 = vsub.f32 %v1034, %v1032
    %v1036 = vmul.f32 %v1000, %v997
    %v1037 = vadd.f32 %v1036, %v1033
    %v1038 = vmul.f32 %v1001, %v993
    %v1039 = vmul.f32 %v1001, %v981
    %v1040 = vmul.f32 %v1000, %v981
    %v1041 = vsub.f32 %v1040, %v1038
    %v1042 = vmul.f32 %v1000, %v993
    %v1043 = vadd.f32 %v1042, %v1039
    %v1044 = vmul.f32 %v1001, %v999
    %v1045 = vmul.f32 %v1001, %v987
    %v1046 = vmul.f32 %v1000, %v987
    %v1047 = vsub.f32 %v1046, %v1044
    %v1048 = vmul.f32 %v1000, %v999
    %v1049 = vadd.f32 %v1048, %v1045
    %v1050 = vstv %s27
    %v1051 = vstv %s35
    %v1052 = vmul.f32 %v1051, %v1029
    %v1053 = vmul.f32 %v1051, %v1005
    %v1054 = vmul.f32 %v1050, %v1005
    %v1055 = vsub.f32 %v1054, %v1052
    %v1056 = vmul.f32 %v1050, %v1029
    %v1057 = vadd.f32 %v1056, %v1053
    %v1058 = vmul.f32 %v1051, %v1035
    %v1059 = vmul.f32 %v1051, %v1011
    %v1060 = vmul.f32 %v1050, %v1011
    %v1061 = vsub.f32 %v1060, %v1058
    %v1062 = vmul.f32 %v1050, %v1035
    %v1063 = vadd.f32 %v1062, %v1059
    %v1064 = vmul.f32 %v1051, %v1041
    %v1065 = vmul.f32 %v1051, %v1017
    %v1066 = vmul.f32 %v1050, %v1017
    %v1067 = vsub.f32 %v1066, %v1064
    %v1068 = vmul.f32 %v1050, %v1041
    %v1069 = vadd.f32 %v1068, %v1065
    %v1070 = vmul.f32 %v1051, %v1047
    %v1071 = vmul.f32 %v1051, %v1023
    %v1072 = vmul.f32 %v1050, %v1023
    %v1073 = vsub.f32 %v1072, %v1070
    %v1074 = vmul.f32 %v1050, %v1047
    %v1075 = vadd.f32 %v1074, %v1071
    %v1076 = vmul.f32 %v1051, %v1031
    %v1077 = vmul.f32 %v1051, %v1007
    %v1078 = vmul.f32 %v1050, %v1007
    %v1079 = vsub.f32 %v1078, %v1076
    %v1080 = vmul.f32 %v1050, %v1031
    %v1081 = vadd.f32 %v1080, %v1077
    %v1082 = vmul.f32 %v1051, %v1037
    %v1083 = vmul.f32 %v1051, %v1013
    %v1084 = vmul.f32 %v1050, %v1013
    %v1085 = vsub.f32 %v1084, %v1082
    %v1086 = vmul.f32 %v1050, %v1037
    %v1087 = vadd.f32 %v1086, %v1083
    %v1088 = vmul.f32 %v1051, %v1043
    %v1089 = vmul.f32 %v1051, %v1019
    %v1090 = vmul.f32 %v1050, %v1019
    %v1091 = vsub.f32 %v1090, %v1088
    %v1092 = vmul.f32 %v1050, %v1043
    %v1093 = vadd.f32 %v1092, %v1089
    %v1094 = vmul.f32 %v1051, %v1049
    %v1095 = vmul.f32 %v1051, %v1025
    %v1096 = vmul.f32 %v1050, %v1025
    %v1097 = vsub.f32 %v1096, %v1094
    %v1098 = vmul.f32 %v1050, %v1049
    %v1099 = vadd.f32 %v1098, %v1095
    %v1100 = vstv %s28
    %v1101 = vstv %s36
    %v1102 = vmul.f32 %v1101, %v1061
    %v1103 = vmul.f32 %v1101, %v1055
    %v1104 = vmul.f32 %v1100, %v1055
    %v1105 = vsub.f32 %v1104, %v1102
    %v1106 = vmul.f32 %v1100, %v1061
    %v1107 = vadd.f32 %v1106, %v1103
    %v1108 = vmul.f32 %v1101, %v1073
    %v1109 = vmul.f32 %v1101, %v1067
    %v1110 = vmul.f32 %v1100, %v1067
    %v1111 = vadd.f32 %v1110, %v1108
    %v1112 = vmul.f32 %v1100, %v1073
    %v1113 = vsub.f32 %v1112, %v1109
    %v1114 = vmul.f32 %v1101, %v1085
    %v1115 = vmul.f32 %v1101, %v1079
    %v1116 = vmul.f32 %v1100, %v1079
    %v1117 = vsub.f32 %v1116, %v1114
    %v1118 = vmul.f32 %v1100, %v1085
    %v1119 = vadd.f32 %v1118, %v1115
    %v1120 = vmul.f32 %v1101, %v1097
    %v1121 = vmul.f32 %v1101, %v1091
    %v1122 = vmul.f32 %v1100, %v1091
    %v1123 = vadd.f32 %v1122, %v1120
    %v1124 = vmul.f32 %v1100, %v1097
    %v1125 = vsub.f32 %v1124, %v1121
    %v1126 = vmul.f32 %v1101, %v1063
    %v1127 = vmul.f32 %v1101, %v1057
    %v1128 = vmul.f32 %v1100, %v1057
    %v1129 = vadd.f32 %v1128, %v1126
    %v1130 = vmul.f32 %v1100, %v1063
    %v1131 = vsub.f32 %v1130, %v1127
    %v1132 = vmul.f32 %v1101, %v1075
    %v1133 = vmul.f32 %v1101, %v1069
    %v1134 = vmul.f32 %v1100, %v1069
    %v1135 = vsub.f32 %v1134, %v1132
    %v1136 = vmul.f32 %v1100, %v1075
    %v1137 = vadd.f32 %v1136, %v1133
    %v1138 = vmul.f32 %v1101, %v1087
    %v1139 = vmul.f32 %v1101, %v1081
    %v1140 = vmul.f32 %v1100, %v1081
    %v1141 = vadd.f32 %v1140, %v1138
    %v1142 = vmul.f32 %v1100, %v1087
    %v1143 = vsub.f32 %v1142, %v1139
    %v1144 = vmul.f32 %v1101, %v1099
    %v1145 = vmul.f32 %v1101, %v1093
    %v1146 = vmul.f32 %v1100, %v1093
    %v1147 = vsub.f32 %v1146, %v1144
    %v1148 = vmul.f32 %v1100, %v1099
    %v1149 = vadd.f32 %v1148, %v1145
    %v1150 = vstv %s29
    %v1151 = vstv %s37
    %v1152 = vmul.f32 %v1151, %v1111
    %v1153 = vmul.f32 %v1151, %v1105
    %v1154 = vmul.f32 %v1150, %v1105
    %v1155 = vsub.f32 %v1154, %v1152
    %v1156 = vmul.f32 %v1150, %v1111
    %v1157 = vadd.f32 %v1156, %v1153
    %v1158 = vmul.f32 %v1151, %v1113
    %v1159 = vmul.f32 %v1151, %v1107
    %v1160 = vmul.f32 %v1150, %v1107
    %v1161 = vadd.f32 %v1160, %v1158
    %v1162 = vmul.f32 %v1150, %v1113
    %v1163 = vsub.f32 %v1162, %v1159
    %v1164 = vmul.f32 %v1151, %v1123
    %v1165 = vmul.f32 %v1151, %v1117
    %v1166 = vmul.f32 %v1150, %v1117
    %v1167 = vadd.f32 %v1166, %v1164
    %v1168 = vmul.f32 %v1150, %v1123
    %v1169 = vsub.f32 %v1168, %v1165
    %v1170 = vmul.f32 %v1151, %v1125
    %v1171 = vmul.f32 %v1151, %v1119
    %v1172 = vmul.f32 %v1150, %v1119
    %v1173 = vsub.f32 %v1172, %v1170
    %v1174 = vmul.f32 %v1150, %v1125
    %v1175 = vadd.f32 %v1174, %v1171
    %v1176 = vmul.f32 %v1151, %v1135
    %v1177 = vmul.f32 %v1151, %v1129
    %v1178 = vmul.f32 %v1150, %v1129
    %v1179 = vsub.f32 %v1178, %v1176
    %v1180 = vmul.f32 %v1150, %v1135
    %v1181 = vadd.f32 %v1180, %v1177
    %v1182 = vmul.f32 %v1151, %v1137
    %v1183 = vmul.f32 %v1151, %v1131
    %v1184 = vmul.f32 %v1150, %v1131
    %v1185 = vadd.f32 %v1184, %v1182
    %v1186 = vmul.f32 %v1150, %v1137
    %v1187 = vsub.f32 %v1186, %v1183
    %v1188 = vmul.f32 %v1151, %v1147
    %v1189 = vmul.f32 %v1151, %v1141
    %v1190 = vmul.f32 %v1150, %v1141
    %v1191 = vadd.f32 %v1190, %v1188
    %v1192 = vmul.f32 %v1150, %v1147
    %v1193 = vsub.f32 %v1192, %v1189
    %v1194 = vmul.f32 %v1151, %v1149
    %v1195 = vmul.f32 %v1151, %v1143
    %v1196 = vmul.f32 %v1150, %v1143
    %v1197 = vsub.f32 %v1196, %v1194
    %v1198 = vmul.f32 %v1150, %v1149
    %v1199 = vadd.f32 %v1198, %v1195
    %v1200 = vstv %s30
    %v1201 = vstv %s38
    %v1202 = vmul.f32 %v1201, %v1167
    %v1203 = vmul.f32 %v1201, %v1155
    %v1204 = vmul.f32 %v1200, %v1155
    %v1205 = vsub.f32 %v1204, %v1202
    %v1206 = vmul.f32 %v1200, %v1167
    %v1207 = vadd.f32 %v1206, %v1203
    %v1208 = vmul.f32 %v1201, %v1173
    %v1209 = vmul.f32 %v1201, %v1161
    %v1210 = vmul.f32 %v1200, %v1161
    %v1211 = vsub.f32 %v1210, %v1208
    %v1212 = vmul.f32 %v1200, %v1173
    %v1213 = vadd.f32 %v1212, %v1209
    %v1214 = vmul.f32 %v1201, %v1169
    %v1215 = vmul.f32 %v1201, %v1157
    %v1216 = vmul.f32 %v1200, %v1157
    %v1217 = vadd.f32 %v1216, %v1214
    %v1218 = vmul.f32 %v1200, %v1169
    %v1219 = vsub.f32 %v1218, %v1215
    %v1220 = vmul.f32 %v1201, %v1175
    %v1221 = vmul.f32 %v1201, %v1163
    %v1222 = vmul.f32 %v1200, %v1163
    %v1223 = vadd.f32 %v1222, %v1220
    %v1224 = vmul.f32 %v1200, %v1175
    %v1225 = vsub.f32 %v1224, %v1221
    %v1226 = vmul.f32 %v1201, %v1191
    %v1227 = vmul.f32 %v1201, %v1179
    %v1228 = vmul.f32 %v1200, %v1179
    %v1229 = vadd.f32 %v1228, %v1226
    %v1230 = vmul.f32 %v1200, %v1191
    %v1231 = vsub.f32 %v1230, %v1227
    %v1232 = vmul.f32 %v1201, %v1197
    %v1233 = vmul.f32 %v1201, %v1185
    %v1234 = vmul.f32 %v1200, %v1185
    %v1235 = vadd.f32 %v1234, %v1232
    %v1236 = vmul.f32 %v1200, %v1197
    %v1237 = vsub.f32 %v1236, %v1233
    %v1238 = vmul.f32 %v1201, %v1193
    %v1239 = vmul.f32 %v1201, %v1181
    %v1240 = vmul.f32 %v1200, %v1181
    %v1241 = vsub.f32 %v1240, %v1238
    %v1242 = vmul.f32 %v1200, %v1193
    %v1243 = vadd.f32 %v1242, %v1239
    %v1244 = vmul.f32 %v1201, %v1199
    %v1245 = vmul.f32 %v1201, %v1187
    %v1246 = vmul.f32 %v1200, %v1187
    %v1247 = vsub.f32 %v1246, %v1244
    %v1248 = vmul.f32 %v1200, %v1199
    %v1249 = vadd.f32 %v1248, %v1245
    %v1250 = vstv %s31
    %v1251 = vstv %s39
    %v1252 = vmul.f32 %v1251, %v1229
    %v1253 = vmul.f32 %v1251, %v1205
    %v1254 = vmul.f32 %v1250, %v1205
    %v1255 = vsub.f32 %v1254, %v1252
    %v1256 = vmul.f32 %v1250, %v1229
    %v1257 = vadd.f32 %v1256, %v1253
    %v1258 = vmul.f32 %v1251, %v1235
    %v1259 = vmul.f32 %v1251, %v1211
    %v1260 = vmul.f32 %v1250, %v1211
    %v1261 = vadd.f32 %v1260, %v1258
    %v1262 = vmul.f32 %v1250, %v1235
    %v1263 = vsub.f32 %v1262, %v1259
    %v1264 = vmul.f32 %v1251, %v1241
    %v1265 = vmul.f32 %v1251, %v1217
    %v1266 = vmul.f32 %v1250, %v1217
    %v1267 = vsub.f32 %v1266, %v1264
    %v1268 = vmul.f32 %v1250, %v1241
    %v1269 = vadd.f32 %v1268, %v1265
    %v1270 = vmul.f32 %v1251, %v1247
    %v1271 = vmul.f32 %v1251, %v1223
    %v1272 = vmul.f32 %v1250, %v1223
    %v1273 = vadd.f32 %v1272, %v1270
    %v1274 = vmul.f32 %v1250, %v1247
    %v1275 = vsub.f32 %v1274, %v1271
    %v1276 = vmul.f32 %v1251, %v1231
    %v1277 = vmul.f32 %v1251, %v1207
    %v1278 = vmul.f32 %v1250, %v1207
    %v1279 = vadd.f32 %v1278, %v1276
    %v1280 = vmul.f32 %v1250, %v1231
    %v1281 = vsub.f32 %v1280, %v1277
    %v1282 = vmul.f32 %v1251, %v1237
    %v1283 = vmul.f32 %v1251, %v1213
    %v1284 = vmul.f32 %v1250, %v1213
    %v1285 = vsub.f32 %v1284, %v1282
    %v1286 = vmul.f32 %v1250, %v1237
    %v1287 = vadd.f32 %v1286, %v1283
    %v1288 = vmul.f32 %v1251, %v1243
    %v1289 = vmul.f32 %v1251, %v1219
    %v1290 = vmul.f32 %v1250, %v1219
    %v1291 = vadd.f32 %v1290, %v1288
    %v1292 = vmul.f32 %v1250, %v1243
    %v1293 = vsub.f32 %v1292, %v1289
    %v1294 = vmul.f32 %v1251, %v1249
    %v1295 = vmul.f32 %v1251, %v1225
    %v1296 = vmul.f32 %v1250, %v1225
    %v1297 = vsub.f32 %v1296, %v1294
    %v1298 = vmul.f32 %v1250, %v1249
    %v1299 = vadd.f32 %v1298, %v1295
    %v1300 = vmul.f32 %v1255, %v1255
    %v1301 = vmul.f32 %v1261, %v1261
    %v1302 = vmul.f32 %v1267, %v1267
    %v1303 = vmul.f32 %v1273, %v1273
    %v1304 = vmul.f32 %v1279, %v1279
    %v1305 = vmul.f32 %v1285, %v1285
    %v1306 = vmul.f32 %v1291, %v1291
    %v1307 = vmul.f32 %v1297, %v1297
    %v1308 = vmul.f32 %v1257, %v1257
    %v1309 = vmul.f32 %v1263, %v1263
    %v1310 = vmul.f32 %v1269, %v1269
    %v1311 = vmul.f32 %v1275, %v1275
    %v1312 = vmul.f32 %v1281, %v1281
    %v1313 = vmul.f32 %v1287, %v1287
    %v1314 = vmul.f32 %v1293, %v1293
    %v1315 = vmul.f32 %v1299, %v1299
    %v1316 = vadd.f32 %v1300, %v1301
    %v1317 = vadd.f32 %v1302, %v1303
    %v1318 = vadd.f32 %v1304, %v1305
    %v1319 = vadd.f32 %v1306, %v1307
    %v1320 = vadd.f32 %v1308, %v1309
    %v1321 = vadd.f32 %v1310, %v1311
    %v1322 = vadd.f32 %v1312, %v1313
    %v1323 = vadd.f32 %v1314, %v1315
    %v1324 = vsub.f32 %v1300, %v1301
    %v1325 = vsub.f32 %v1302, %v1303
    %v1326 = vsub.f32 %v1304, %v1305
    %v1327 = vsub.f32 %v1306, %v1307
    %v1328 = vsub.f32 %v1308, %v1309
    %v1329 = vsub.f32 %v1310, %v1311
    %v1330 = vsub.f32 %v1312, %v1313
    %v1331 = vsub.f32 %v1314, %v1315
    %v1332 = vadd.f32 %v1324, %v1325
    %v1333 = vadd.f32 %v1326, %v1327
    %v1334 = vadd.f32 %v1328, %v1329
    %v1335 = vadd.f32 %v1330, %v1331
    %v1336 = vadd.f32 %v1332, %v1333
    %v1337 = vadd.f32 %v1334, %v1335
    %v1338 = vadd.f32 %v1336, %v1337
    %v1339 = vadd.f32 %v1316, %v1317
    %v1340 = vadd.f32 %v1318, %v1319
    %v1341 = vadd.f32 %v1320, %v1321
    %v1342 = vadd.f32 %v1322, %v1323
    %v1343 = vsub.f32 %v1316, %v1317
    %v1344 = vsub.f32 %v1318, %v1319
    %v1345 = vsub.f32 %v1320, %v1321
    %v1346 = vsub.f32 %v1322, %v1323
    %v1347 = vadd.f32 %v1343, %v1344
    %v1348 = vadd.f32 %v1345, %v1346
    %v1349 = vadd.f32 %v1347, %v1348
    %v1350 = vadd.f32 %v1339, %v1340
    %v1351 = vadd.f32 %v1341, %v1342
    %v1352 = vsub.f32 %v1339, %v1340
    %v1353 = vsub.f32 %v1341, %v1342
    %v1354 = vadd.f32 %v1352, %v1353
    %v1355 = vsub.f32 %v1350, %v1351
    %1356 = vst [vmem:[%s2] sm:$0xff] %v1338
    %s1357 = scalar_lea.vmem %s2, 8
    %1358 = vst [vmem:[%s1357] sm:$0xff] %v1349
    %s1359 = scalar_lea.vmem %s2, 16
    %1360 = vst [vmem:[%s1359] sm:$0xff] %v1354
    %s1361 = scalar_lea.vmem %s2, 24
    %1362 = vst [vmem:[%s1361] sm:$0xff] %v1355
    // Predicated region
    $region14: #{_qae_forward_impl.1} parent=1 // pred_check
      _
    $region15: #{_qae_forward_impl.1} parent=1 // pred_check_branch
      %1364 = sbr.rel (0) target = $region17
    $region16: #{_qae_forward_impl.1} parent=1 // pred_region
      _
    $region17: #{_qae_forward_impl.1} parent=1 // pred_fallthru
      _
    // Predicated region
    $region18: #{_qae_forward_impl.1} parent=1 // pred_check
      _
    $region19: #{_qae_forward_impl.1} parent=1 // pred_check_branch
      %1366 = sbr.rel (0) target = $region21
    $region20: #{_qae_forward_impl.1} parent=1 // pred_region
      _
    $region21: #{_qae_forward_impl.1} parent=1 // pred_fallthru
      _
    %1367 = vsyncpa [#allocation3], 1

</llo_original>
